<compile_context>
chip_gen: v6e
topology: v6e:2x2x1
jax: 0.10.0
libtpu: 0.0.40
codegen_flags: <defaults>
</compile_context>

<pallas_src>
import functools
import math

import jax
import jax.numpy as jnp
from jax.experimental import pallas as pl
from jax.experimental.pallas import tpu as pltpu


# ---------------------------------------------------------------------------
# Fused encoder-layer kernel
# ---------------------------------------------------------------------------
def _fused_encoder_kernel(x_ref, wqkv_ref, bqkv_ref, wo_ref, bo_ref,
                          w1_ref, b1_ref, w2_ref, b2_ref,
                          ln1g_ref, ln1b_ref, ln2g_ref, ln2b_ref,
                          o_ref, *, n_head, seq, batch, eps):
    f32 = jnp.float32
    x = x_ref[...]                                           # (B*S, E)
    E = x.shape[1]
    Dh = E // n_head
    scale = 1.0 / math.sqrt(Dh)

    # --- 1) packed in-projection (matches nn.MultiheadAttention in_proj) -----
    qkv = jnp.dot(x, wqkv_ref[...], preferred_element_type=f32) + bqkv_ref[...]

    # --- 2) per-(batch, head) attention; out-projection folded into the loop
    # concat_h(o_h) @ Wo  ==  sum_h  o_h @ Wo[h*Dh:(h+1)*Dh, :]
    wo = wo_ref[...]                                         # (E, E) = out_proj_w.T
    batch_outs = []
    for b in range(batch):                                   # tiny static loops,
        r0 = b * seq                                         # unrolled at trace time
        qkv_b = qkv[r0:r0 + seq, :]                          # (S, 3E)
        acc = jnp.zeros((seq, E), f32)
        for h in range(n_head):
            c = h * Dh
            q = qkv_b[:, c:c + Dh] * scale                   # (S, Dh)
            k = qkv_b[:, E + c:E + c + Dh]
            v = qkv_b[:, 2 * E + c:2 * E + c + Dh]
            # q · kᵀ without materializing a transposed K
            s = jax.lax.dot_general(q, k, (((1,), (1,)), ((), ())),
                                    preferred_element_type=f32)      # (S, S)
            s = s - jnp.max(s, axis=-1, keepdims=True)
            p = jnp.exp(s)
            p = p * pl.reciprocal(jnp.sum(p, axis=-1, keepdims=True), approx=True)
            o_h = jnp.dot(p, v, preferred_element_type=f32)          # (S, Dh)
            acc = acc + jnp.dot(o_h, wo[c:c + Dh, :],
                                preferred_element_type=f32)          # (S, E)
        batch_outs.append(acc)
    attn_out = jnp.concatenate(batch_outs, axis=0) + bo_ref[...]     # (B*S, E)

    # --- 3) residual + LayerNorm 1 (dropout identity in eval) ---------------
    y = x + attn_out
    mu = jnp.mean(y, axis=-1, keepdims=True)
    var = jnp.mean(jnp.square(y - mu), axis=-1, keepdims=True)
    src = (y - mu) * jax.lax.rsqrt(var + eps) * ln1g_ref[...] + ln1b_ref[...]

    # --- 4) feed-forward: linear2(relu(linear1(src))) ------------------------
    hmat = jnp.dot(src, w1_ref[...], preferred_element_type=f32) + b1_ref[...]
    hmat = jnp.maximum(hmat, 0.0)
    ff = jnp.dot(hmat, w2_ref[...], preferred_element_type=f32) + b2_ref[...]

    # --- 5) residual + LayerNorm 2 -------------------------------------------
    z = src + ff
    mu2 = jnp.mean(z, axis=-1, keepdims=True)
    var2 = jnp.mean(jnp.square(z - mu2), axis=-1, keepdims=True)
    o_ref[...] = (z - mu2) * jax.lax.rsqrt(var2 + eps) * ln2g_ref[...] + ln2b_ref[...]


def fused_encoder_layer(x2d, params, *, n_head, seq, batch, eps=1e-5):
    """Run the whole encoder layer in one pallas_call on a (B*S, E) slab."""
    M, E = x2d.shape
    F = params["w1"].shape[0]

    args = [
        x2d,
        params["in_proj_w"].T, params["in_proj_b"].reshape(1, 3 * E),
        params["out_proj_w"].T, params["out_proj_b"].reshape(1, E),
        params["w1"].T, params["b1"].reshape(1, F),
        params["w2"].T, params["b2"].reshape(1, E),
        params["ln1_g"].reshape(1, E), params["ln1_b"].reshape(1, E),
        params["ln2_g"].reshape(1, E), params["ln2_b"].reshape(1, E),
    ]
    # Everything fits trivially in VMEM at these sizes: full-array blocks.
    # TODO(synk): at realistic sizes (d_model>=512, d_ff>=2048, S*B in the
    # thousands) the matmuls need (tm,tn,tk) tiling with a K-reduction grid
    # axis and per-generation VMEM budgets; not needed for this spec's shapes.
    in_specs = [pl.BlockSpec(a.shape, lambda i: (0, 0)) for a in args]

    return pl.pallas_call(
        functools.partial(_fused_encoder_kernel, n_head=n_head, seq=seq,
                          batch=batch, eps=eps),
        out_shape=jax.ShapeDtypeStruct((M, E), jnp.float32),
        grid=(1,),
        in_specs=in_specs,
        out_specs=pl.BlockSpec((M, E), lambda i: (0, 0)),
        compiler_params=pltpu.CompilerParams(
            dimension_semantics=("arbitrary",)),
    )(*args)


# ---------------------------------------------------------------------------
# Parameters (deterministic, in-script)
# ---------------------------------------------------------------------------
def init_params(key, vocab_size, d_model, d_ff, max_seq_len):
    keys = jax.random.split(key, 7)

    def uni(k, shape, fan_in):
        bound = 1.0 / math.sqrt(fan_in)
        return jax.random.uniform(k, shape, jnp.float32, -bound, bound)

    params = {
        "emb": jax.random.normal(keys[0], (vocab_size, d_model), jnp.float32),
        # nn.MultiheadAttention packed in-projection: (3E, E) weight, (3E,) bias
        "in_proj_w": uni(keys[1], (3 * d_model, d_model), d_model),
        "in_proj_b": jnp.zeros((3 * d_model,), jnp.float32),
        "out_proj_w": uni(keys[2], (d_model, d_model), d_model),
        "out_proj_b": jnp.zeros((d_model,), jnp.float32),
        # feed-forward (PyTorch Linear stores weight as (out, in))
        "w1": uni(keys[3], (d_ff, d_model), d_model),
        "b1": uni(keys[4], (d_ff,), d_model),
        "w2": uni(keys[5], (d_model, d_ff), d_ff),
        "b2": uni(keys[6], (d_model,), d_ff),
        # LayerNorm defaults: weight=1, bias=0
        "ln1_g": jnp.ones((d_model,), jnp.float32),
        "ln1_b": jnp.zeros((d_model,), jnp.float32),
        "ln2_g": jnp.ones((d_model,), jnp.float32),
        "ln2_b": jnp.zeros((d_model,), jnp.float32),
    }
    # sinusoidal positional encoding table (max_seq_len, d_model)
    pos = jnp.arange(max_seq_len, dtype=jnp.float32)[:, None]
    div = jnp.exp(jnp.arange(0, d_model, 2, dtype=jnp.float32)
                  * (-math.log(10000.0) / d_model))
    pe = jnp.zeros((max_seq_len, d_model), jnp.float32)
    pe = pe.at[:, 0::2].set(jnp.sin(pos * div))
    pe = pe.at[:, 1::2].set(jnp.cos(pos * div))
    params["pe"] = pe
    return params


# ---------------------------------------------------------------------------
# Forward pass (embedding gather in JAX, everything else in one Pallas kernel)
# ---------------------------------------------------------------------------
def transformer_encoder_layer(tokens, params, *, n_head):
    S, B = tokens.shape
    d_model = params["emb"].shape[1]

    # TODO(synk): TransEmbedding is not defined in the source file; assuming the
    # standard token-embedding * sqrt(d_model) + sinusoidal positional encoding.
    emb = params["emb"][tokens] * math.sqrt(d_model) + params["pe"][:S][:, None, :]

    # (S, B, E) -> (B*S, E) row-major slab (row = b*S + s)
    x2d = emb.transpose(1, 0, 2).reshape(B * S, d_model)

    out2d = fused_encoder_layer(x2d, params, n_head=n_head, seq=S, batch=B)

    # back to PyTorch's (S, B, E) convention
    return out2d.reshape(B, S, d_model).transpose(1, 0, 2)


# ---------------------------------------------------------------------------
if __name__ == "__main__":
    # Small shapes consistent with the module's forward: d_model=32, heads=4,
    # ff=64, vocab=64, seq=8, batch=2.
    d_model, n_head, d_ff, vocab = 32, 4, 64, 64
    S, B = 8, 2

    key = jax.random.PRNGKey(0)
    pkey, tkey = jax.random.split(key)
    params = init_params(pkey, vocab, d_model, d_ff, max_seq_len=100)
    tokens = jax.random.randint(tkey, (S, B), 0, vocab, dtype=jnp.int32)

    fwd = jax.jit(functools.partial(transformer_encoder_layer, n_head=n_head))
    out = fwd(tokens, params)
    jax.block_until_ready(out)

    assert out.shape == (S, B, d_model)
    assert out.dtype == jnp.float32
    assert bool(jnp.all(jnp.isfinite(out)))
    print("KERNEL_OK")
</pallas_src>

<mosaic_0001>
module attributes {stable_mosaic.version = 11 : i64} {
  func.func @_fused_encoder_kernel(%arg0: i32, %arg1: memref<16x32xf32, #tpu.memory_space<vmem>>, %arg2: memref<32x96xf32, #tpu.memory_space<vmem>>, %arg3: memref<1x96xf32, #tpu.memory_space<vmem>>, %arg4: memref<32x32xf32, #tpu.memory_space<vmem>>, %arg5: memref<1x32xf32, #tpu.memory_space<vmem>>, %arg6: memref<32x64xf32, #tpu.memory_space<vmem>>, %arg7: memref<1x64xf32, #tpu.memory_space<vmem>>, %arg8: memref<64x32xf32, #tpu.memory_space<vmem>>, %arg9: memref<1x32xf32, #tpu.memory_space<vmem>>, %arg10: memref<1x32xf32, #tpu.memory_space<vmem>>, %arg11: memref<1x32xf32, #tpu.memory_space<vmem>>, %arg12: memref<1x32xf32, #tpu.memory_space<vmem>>, %arg13: memref<1x32xf32, #tpu.memory_space<vmem>>, %arg14: memref<16x32xf32, #tpu.memory_space<vmem>>) attributes {dimension_semantics = [#tpu.dimension_semantics<arbitrary>], iteration_bounds = array<i64: 1>, scalar_prefetch = 0 : i64, scratch_operands = 0 : i64, tpu.core_type = #tpu.core_type<tc>, window_params = [{pipeline_mode = #tpu.pipeline_mode<synchronous>, transform_indices = @transform_0, window_bounds = array<i64: 16, 32>}, {pipeline_mode = #tpu.pipeline_mode<synchronous>, transform_indices = @transform_1, window_bounds = array<i64: 32, 96>}, {pipeline_mode = #tpu.pipeline_mode<synchronous>, transform_indices = @transform_2, window_bounds = array<i64: 1, 96>}, {pipeline_mode = #tpu.pipeline_mode<synchronous>, transform_indices = @transform_3, window_bounds = array<i64: 32, 32>}, {pipeline_mode = #tpu.pipeline_mode<synchronous>, transform_indices = @transform_4, window_bounds = array<i64: 1, 32>}, {pipeline_mode = #tpu.pipeline_mode<synchronous>, transform_indices = @transform_5, window_bounds = array<i64: 32, 64>}, {pipeline_mode = #tpu.pipeline_mode<synchronous>, transform_indices = @transform_6, window_bounds = array<i64: 1, 64>}, {pipeline_mode = #tpu.pipeline_mode<synchronous>, transform_indices = @transform_7, window_bounds = array<i64: 64, 32>}, {pipeline_mode = #tpu.pipeline_mode<synchronous>, transform_indices = @transform_8, window_bounds = array<i64: 1, 32>}, {pipeline_mode = #tpu.pipeline_mode<synchronous>, transform_indices = @transform_9, window_bounds = array<i64: 1, 32>}, {pipeline_mode = #tpu.pipeline_mode<synchronous>, transform_indices = @transform_10, window_bounds = array<i64: 1, 32>}, {pipeline_mode = #tpu.pipeline_mode<synchronous>, transform_indices = @transform_11, window_bounds = array<i64: 1, 32>}, {pipeline_mode = #tpu.pipeline_mode<synchronous>, transform_indices = @transform_12, window_bounds = array<i64: 1, 32>}, {pipeline_mode = #tpu.pipeline_mode<synchronous>, transform_indices = @transform_13, window_bounds = array<i64: 16, 32>}]} {
    %c0 = arith.constant 0 : index
    %c0_0 = arith.constant 0 : index
    %0 = vector.load %arg1[%c0, %c0_0] : memref<16x32xf32, #tpu.memory_space<vmem>>, vector<16x32xf32>
    %c0_1 = arith.constant 0 : index
    %c0_2 = arith.constant 0 : index
    %1 = vector.load %arg2[%c0_1, %c0_2] : memref<32x96xf32, #tpu.memory_space<vmem>>, vector<32x96xf32>
    %cst = arith.constant dense<0.000000e+00> : vector<16x96xf32>
    %2 = tpu.matmul %0, %1, %cst {dimension_numbers = #tpu.dot_dimension_numbers<[1], [0], [0], [1], [0, 0, 1, 1], [], []>} : vector<16x32xf32>, vector<32x96xf32>, vector<16x96xf32> -> vector<16x96xf32>
    %c0_3 = arith.constant 0 : index
    %c0_4 = arith.constant 0 : index
    %3 = vector.load %arg3[%c0_3, %c0_4] : memref<1x96xf32, #tpu.memory_space<vmem>>, vector<1x96xf32>
    %4 = vector.broadcast %3 : vector<1x96xf32> to vector<16x96xf32>
    %5 = arith.addf %2, %4 : vector<16x96xf32>
    %c0_5 = arith.constant 0 : index
    %c0_6 = arith.constant 0 : index
    %6 = vector.load %arg4[%c0_5, %c0_6] : memref<32x32xf32, #tpu.memory_space<vmem>>, vector<32x32xf32>
    %7 = vector.extract_strided_slice %5 {offsets = [0, 0], sizes = [8, 96], strides = [1, 1]} : vector<16x96xf32> to vector<8x96xf32>
    %cst_7 = arith.constant 0.000000e+00 : f32
    %8 = vector.broadcast %cst_7 : f32 to vector<8x32xf32>
    %9 = vector.extract_strided_slice %7 {offsets = [0, 0], sizes = [8, 8], strides = [1, 1]} : vector<8x96xf32> to vector<8x8xf32>
    %cst_8 = arith.constant 0.353553385 : f32
    %10 = vector.broadcast %cst_8 : f32 to vector<8x8xf32>
    %11 = arith.mulf %9, %10 : vector<8x8xf32>
    %12 = vector.extract_strided_slice %7 {offsets = [0, 32], sizes = [8, 8], strides = [1, 1]} : vector<8x96xf32> to vector<8x8xf32>
    %13 = vector.extract_strided_slice %7 {offsets = [0, 64], sizes = [8, 8], strides = [1, 1]} : vector<8x96xf32> to vector<8x8xf32>
    %cst_9 = arith.constant dense<0.000000e+00> : vector<8x8xf32>
    %14 = tpu.matmul %11, %12, %cst_9 {dimension_numbers = #tpu.dot_dimension_numbers<[1], [1], [0], [0], [0, 0, 1, 0], [], []>} : vector<8x8xf32>, vector<8x8xf32>, vector<8x8xf32> -> vector<8x8xf32>
    %cst_10 = arith.constant dense<0xFF800000> : vector<8xf32>
    %15 = vector.multi_reduction <maximumf>, %14, %cst_10 [1] : vector<8x8xf32> to vector<8xf32>
    %16 = vector.shape_cast %15 : vector<8xf32> to vector<8x1xf32>
    %17 = vector.broadcast %16 : vector<8x1xf32> to vector<8x8xf32>
    %18 = arith.subf %14, %17 : vector<8x8xf32>
    %19 = math.exp %18 : vector<8x8xf32>
    %cst_11 = arith.constant dense<0.000000e+00> : vector<8xf32>
    %20 = vector.multi_reduction <add>, %19, %cst_11 [1] : vector<8x8xf32> to vector<8xf32>
    %21 = vector.shape_cast %20 : vector<8xf32> to vector<8x1xf32>
    %22 = tpu.reciprocal %21 {approx = true} : vector<8x1xf32> -> vector<8x1xf32>
    %23 = vector.broadcast %22 : vector<8x1xf32> to vector<8x8xf32>
    %24 = arith.mulf %19, %23 : vector<8x8xf32>
    %cst_12 = arith.constant dense<0.000000e+00> : vector<8x8xf32>
    %25 = tpu.matmul %24, %13, %cst_12 {dimension_numbers = #tpu.dot_dimension_numbers<[1], [0], [0], [1], [0, 0, 1, 1], [], []>} : vector<8x8xf32>, vector<8x8xf32>, vector<8x8xf32> -> vector<8x8xf32>
    %26 = vector.extract_strided_slice %6 {offsets = [0, 0], sizes = [8, 32], strides = [1, 1]} : vector<32x32xf32> to vector<8x32xf32>
    %cst_13 = arith.constant dense<0.000000e+00> : vector<8x32xf32>
    %27 = tpu.matmul %25, %26, %cst_13 {dimension_numbers = #tpu.dot_dimension_numbers<[1], [0], [0], [1], [0, 0, 1, 1], [], []>} : vector<8x8xf32>, vector<8x32xf32>, vector<8x32xf32> -> vector<8x32xf32>
    %28 = arith.addf %8, %27 : vector<8x32xf32>
    %29 = vector.extract_strided_slice %7 {offsets = [0, 8], sizes = [8, 8], strides = [1, 1]} : vector<8x96xf32> to vector<8x8xf32>
    %cst_14 = arith.constant 0.353553385 : f32
    %30 = vector.broadcast %cst_14 : f32 to vector<8x8xf32>
    %31 = arith.mulf %29, %30 : vector<8x8xf32>
    %32 = vector.extract_strided_slice %7 {offsets = [0, 40], sizes = [8, 8], strides = [1, 1]} : vector<8x96xf32> to vector<8x8xf32>
    %33 = vector.extract_strided_slice %7 {offsets = [0, 72], sizes = [8, 8], strides = [1, 1]} : vector<8x96xf32> to vector<8x8xf32>
    %cst_15 = arith.constant dense<0.000000e+00> : vector<8x8xf32>
    %34 = tpu.matmul %31, %32, %cst_15 {dimension_numbers = #tpu.dot_dimension_numbers<[1], [1], [0], [0], [0, 0, 1, 0], [], []>} : vector<8x8xf32>, vector<8x8xf32>, vector<8x8xf32> -> vector<8x8xf32>
    %cst_16 = arith.constant dense<0xFF800000> : vector<8xf32>
    %35 = vector.multi_reduction <maximumf>, %34, %cst_16 [1] : vector<8x8xf32> to vector<8xf32>
    %36 = vector.shape_cast %35 : vector<8xf32> to vector<8x1xf32>
    %37 = vector.broadcast %36 : vector<8x1xf32> to vector<8x8xf32>
    %38 = arith.subf %34, %37 : vector<8x8xf32>
    %39 = math.exp %38 : vector<8x8xf32>
    %cst_17 = arith.constant dense<0.000000e+00> : vector<8xf32>
    %40 = vector.multi_reduction <add>, %39, %cst_17 [1] : vector<8x8xf32> to vector<8xf32>
    %41 = vector.shape_cast %40 : vector<8xf32> to vector<8x1xf32>
    %42 = tpu.reciprocal %41 {approx = true} : vector<8x1xf32> -> vector<8x1xf32>
    %43 = vector.broadcast %42 : vector<8x1xf32> to vector<8x8xf32>
    %44 = arith.mulf %39, %43 : vector<8x8xf32>
    %cst_18 = arith.constant dense<0.000000e+00> : vector<8x8xf32>
    %45 = tpu.matmul %44, %33, %cst_18 {dimension_numbers = #tpu.dot_dimension_numbers<[1], [0], [0], [1], [0, 0, 1, 1], [], []>} : vector<8x8xf32>, vector<8x8xf32>, vector<8x8xf32> -> vector<8x8xf32>
    %46 = vector.extract_strided_slice %6 {offsets = [8, 0], sizes = [8, 32], strides = [1, 1]} : vector<32x32xf32> to vector<8x32xf32>
    %cst_19 = arith.constant dense<0.000000e+00> : vector<8x32xf32>
    %47 = tpu.matmul %45, %46, %cst_19 {dimension_numbers = #tpu.dot_dimension_numbers<[1], [0], [0], [1], [0, 0, 1, 1], [], []>} : vector<8x8xf32>, vector<8x32xf32>, vector<8x32xf32> -> vector<8x32xf32>
    %48 = arith.addf %28, %47 : vector<8x32xf32>
    %49 = vector.extract_strided_slice %7 {offsets = [0, 16], sizes = [8, 8], strides = [1, 1]} : vector<8x96xf32> to vector<8x8xf32>
    %cst_20 = arith.constant 0.353553385 : f32
    %50 = vector.broadcast %cst_20 : f32 to vector<8x8xf32>
    %51 = arith.mulf %49, %50 : vector<8x8xf32>
    %52 = vector.extract_strided_slice %7 {offsets = [0, 48], sizes = [8, 8], strides = [1, 1]} : vector<8x96xf32> to vector<8x8xf32>
    %53 = vector.extract_strided_slice %7 {offsets = [0, 80], sizes = [8, 8], strides = [1, 1]} : vector<8x96xf32> to vector<8x8xf32>
    %cst_21 = arith.constant dense<0.000000e+00> : vector<8x8xf32>
    %54 = tpu.matmul %51, %52, %cst_21 {dimension_numbers = #tpu.dot_dimension_numbers<[1], [1], [0], [0], [0, 0, 1, 0], [], []>} : vector<8x8xf32>, vector<8x8xf32>, vector<8x8xf32> -> vector<8x8xf32>
    %cst_22 = arith.constant dense<0xFF800000> : vector<8xf32>
    %55 = vector.multi_reduction <maximumf>, %54, %cst_22 [1] : vector<8x8xf32> to vector<8xf32>
    %56 = vector.shape_cast %55 : vector<8xf32> to vector<8x1xf32>
    %57 = vector.broadcast %56 : vector<8x1xf32> to vector<8x8xf32>
    %58 = arith.subf %54, %57 : vector<8x8xf32>
    %59 = math.exp %58 : vector<8x8xf32>
    %cst_23 = arith.constant dense<0.000000e+00> : vector<8xf32>
    %60 = vector.multi_reduction <add>, %59, %cst_23 [1] : vector<8x8xf32> to vector<8xf32>
    %61 = vector.shape_cast %60 : vector<8xf32> to vector<8x1xf32>
    %62 = tpu.reciprocal %61 {approx = true} : vector<8x1xf32> -> vector<8x1xf32>
    %63 = vector.broadcast %62 : vector<8x1xf32> to vector<8x8xf32>
    %64 = arith.mulf %59, %63 : vector<8x8xf32>
    %cst_24 = arith.constant dense<0.000000e+00> : vector<8x8xf32>
    %65 = tpu.matmul %64, %53, %cst_24 {dimension_numbers = #tpu.dot_dimension_numbers<[1], [0], [0], [1], [0, 0, 1, 1], [], []>} : vector<8x8xf32>, vector<8x8xf32>, vector<8x8xf32> -> vector<8x8xf32>
    %66 = vector.extract_strided_slice %6 {offsets = [16, 0], sizes = [8, 32], strides = [1, 1]} : vector<32x32xf32> to vector<8x32xf32>
    %cst_25 = arith.constant dense<0.000000e+00> : vector<8x32xf32>
    %67 = tpu.matmul %65, %66, %cst_25 {dimension_numbers = #tpu.dot_dimension_numbers<[1], [0], [0], [1], [0, 0, 1, 1], [], []>} : vector<8x8xf32>, vector<8x32xf32>, vector<8x32xf32> -> vector<8x32xf32>
    %68 = arith.addf %48, %67 : vector<8x32xf32>
    %69 = vector.extract_strided_slice %7 {offsets = [0, 24], sizes = [8, 8], strides = [1, 1]} : vector<8x96xf32> to vector<8x8xf32>
    %cst_26 = arith.constant 0.353553385 : f32
    %70 = vector.broadcast %cst_26 : f32 to vector<8x8xf32>
    %71 = arith.mulf %69, %70 : vector<8x8xf32>
    %72 = vector.extract_strided_slice %7 {offsets = [0, 56], sizes = [8, 8], strides = [1, 1]} : vector<8x96xf32> to vector<8x8xf32>
    %73 = vector.extract_strided_slice %7 {offsets = [0, 88], sizes = [8, 8], strides = [1, 1]} : vector<8x96xf32> to vector<8x8xf32>
    %cst_27 = arith.constant dense<0.000000e+00> : vector<8x8xf32>
    %74 = tpu.matmul %71, %72, %cst_27 {dimension_numbers = #tpu.dot_dimension_numbers<[1], [1], [0], [0], [0, 0, 1, 0], [], []>} : vector<8x8xf32>, vector<8x8xf32>, vector<8x8xf32> -> vector<8x8xf32>
    %cst_28 = arith.constant dense<0xFF800000> : vector<8xf32>
    %75 = vector.multi_reduction <maximumf>, %74, %cst_28 [1] : vector<8x8xf32> to vector<8xf32>
    %76 = vector.shape_cast %75 : vector<8xf32> to vector<8x1xf32>
    %77 = vector.broadcast %76 : vector<8x1xf32> to vector<8x8xf32>
    %78 = arith.subf %74, %77 : vector<8x8xf32>
    %79 = math.exp %78 : vector<8x8xf32>
    %cst_29 = arith.constant dense<0.000000e+00> : vector<8xf32>
    %80 = vector.multi_reduction <add>, %79, %cst_29 [1] : vector<8x8xf32> to vector<8xf32>
    %81 = vector.shape_cast %80 : vector<8xf32> to vector<8x1xf32>
    %82 = tpu.reciprocal %81 {approx = true} : vector<8x1xf32> -> vector<8x1xf32>
    %83 = vector.broadcast %82 : vector<8x1xf32> to vector<8x8xf32>
    %84 = arith.mulf %79, %83 : vector<8x8xf32>
    %cst_30 = arith.constant dense<0.000000e+00> : vector<8x8xf32>
    %85 = tpu.matmul %84, %73, %cst_30 {dimension_numbers = #tpu.dot_dimension_numbers<[1], [0], [0], [1], [0, 0, 1, 1], [], []>} : vector<8x8xf32>, vector<8x8xf32>, vector<8x8xf32> -> vector<8x8xf32>
    %86 = vector.extract_strided_slice %6 {offsets = [24, 0], sizes = [8, 32], strides = [1, 1]} : vector<32x32xf32> to vector<8x32xf32>
    %cst_31 = arith.constant dense<0.000000e+00> : vector<8x32xf32>
    %87 = tpu.matmul %85, %86, %cst_31 {dimension_numbers = #tpu.dot_dimension_numbers<[1], [0], [0], [1], [0, 0, 1, 1], [], []>} : vector<8x8xf32>, vector<8x32xf32>, vector<8x32xf32> -> vector<8x32xf32>
    %88 = arith.addf %68, %87 : vector<8x32xf32>
    %89 = vector.extract_strided_slice %5 {offsets = [8, 0], sizes = [8, 96], strides = [1, 1]} : vector<16x96xf32> to vector<8x96xf32>
    %cst_32 = arith.constant 0.000000e+00 : f32
    %90 = vector.broadcast %cst_32 : f32 to vector<8x32xf32>
    %91 = vector.extract_strided_slice %89 {offsets = [0, 0], sizes = [8, 8], strides = [1, 1]} : vector<8x96xf32> to vector<8x8xf32>
    %cst_33 = arith.constant 0.353553385 : f32
    %92 = vector.broadcast %cst_33 : f32 to vector<8x8xf32>
    %93 = arith.mulf %91, %92 : vector<8x8xf32>
    %94 = vector.extract_strided_slice %89 {offsets = [0, 32], sizes = [8, 8], strides = [1, 1]} : vector<8x96xf32> to vector<8x8xf32>
    %95 = vector.extract_strided_slice %89 {offsets = [0, 64], sizes = [8, 8], strides = [1, 1]} : vector<8x96xf32> to vector<8x8xf32>
    %cst_34 = arith.constant dense<0.000000e+00> : vector<8x8xf32>
    %96 = tpu.matmul %93, %94, %cst_34 {dimension_numbers = #tpu.dot_dimension_numbers<[1], [1], [0], [0], [0, 0, 1, 0], [], []>} : vector<8x8xf32>, vector<8x8xf32>, vector<8x8xf32> -> vector<8x8xf32>
    %cst_35 = arith.constant dense<0xFF800000> : vector<8xf32>
    %97 = vector.multi_reduction <maximumf>, %96, %cst_35 [1] : vector<8x8xf32> to vector<8xf32>
    %98 = vector.shape_cast %97 : vector<8xf32> to vector<8x1xf32>
    %99 = vector.broadcast %98 : vector<8x1xf32> to vector<8x8xf32>
    %100 = arith.subf %96, %99 : vector<8x8xf32>
    %101 = math.exp %100 : vector<8x8xf32>
    %cst_36 = arith.constant dense<0.000000e+00> : vector<8xf32>
    %102 = vector.multi_reduction <add>, %101, %cst_36 [1] : vector<8x8xf32> to vector<8xf32>
    %103 = vector.shape_cast %102 : vector<8xf32> to vector<8x1xf32>
    %104 = tpu.reciprocal %103 {approx = true} : vector<8x1xf32> -> vector<8x1xf32>
    %105 = vector.broadcast %104 : vector<8x1xf32> to vector<8x8xf32>
    %106 = arith.mulf %101, %105 : vector<8x8xf32>
    %cst_37 = arith.constant dense<0.000000e+00> : vector<8x8xf32>
    %107 = tpu.matmul %106, %95, %cst_37 {dimension_numbers = #tpu.dot_dimension_numbers<[1], [0], [0], [1], [0, 0, 1, 1], [], []>} : vector<8x8xf32>, vector<8x8xf32>, vector<8x8xf32> -> vector<8x8xf32>
    %108 = vector.extract_strided_slice %6 {offsets = [0, 0], sizes = [8, 32], strides = [1, 1]} : vector<32x32xf32> to vector<8x32xf32>
    %cst_38 = arith.constant dense<0.000000e+00> : vector<8x32xf32>
    %109 = tpu.matmul %107, %108, %cst_38 {dimension_numbers = #tpu.dot_dimension_numbers<[1], [0], [0], [1], [0, 0, 1, 1], [], []>} : vector<8x8xf32>, vector<8x32xf32>, vector<8x32xf32> -> vector<8x32xf32>
    %110 = arith.addf %90, %109 : vector<8x32xf32>
    %111 = vector.extract_strided_slice %89 {offsets = [0, 8], sizes = [8, 8], strides = [1, 1]} : vector<8x96xf32> to vector<8x8xf32>
    %cst_39 = arith.constant 0.353553385 : f32
    %112 = vector.broadcast %cst_39 : f32 to vector<8x8xf32>
    %113 = arith.mulf %111, %112 : vector<8x8xf32>
    %114 = vector.extract_strided_slice %89 {offsets = [0, 40], sizes = [8, 8], strides = [1, 1]} : vector<8x96xf32> to vector<8x8xf32>
    %115 = vector.extract_strided_slice %89 {offsets = [0, 72], sizes = [8, 8], strides = [1, 1]} : vector<8x96xf32> to vector<8x8xf32>
    %cst_40 = arith.constant dense<0.000000e+00> : vector<8x8xf32>
    %116 = tpu.matmul %113, %114, %cst_40 {dimension_numbers = #tpu.dot_dimension_numbers<[1], [1], [0], [0], [0, 0, 1, 0], [], []>} : vector<8x8xf32>, vector<8x8xf32>, vector<8x8xf32> -> vector<8x8xf32>
    %cst_41 = arith.constant dense<0xFF800000> : vector<8xf32>
    %117 = vector.multi_reduction <maximumf>, %116, %cst_41 [1] : vector<8x8xf32> to vector<8xf32>
    %118 = vector.shape_cast %117 : vector<8xf32> to vector<8x1xf32>
    %119 = vector.broadcast %118 : vector<8x1xf32> to vector<8x8xf32>
    %120 = arith.subf %116, %119 : vector<8x8xf32>
    %121 = math.exp %120 : vector<8x8xf32>
    %cst_42 = arith.constant dense<0.000000e+00> : vector<8xf32>
    %122 = vector.multi_reduction <add>, %121, %cst_42 [1] : vector<8x8xf32> to vector<8xf32>
    %123 = vector.shape_cast %122 : vector<8xf32> to vector<8x1xf32>
    %124 = tpu.reciprocal %123 {approx = true} : vector<8x1xf32> -> vector<8x1xf32>
    %125 = vector.broadcast %124 : vector<8x1xf32> to vector<8x8xf32>
    %126 = arith.mulf %121, %125 : vector<8x8xf32>
    %cst_43 = arith.constant dense<0.000000e+00> : vector<8x8xf32>
    %127 = tpu.matmul %126, %115, %cst_43 {dimension_numbers = #tpu.dot_dimension_numbers<[1], [0], [0], [1], [0, 0, 1, 1], [], []>} : vector<8x8xf32>, vector<8x8xf32>, vector<8x8xf32> -> vector<8x8xf32>
    %128 = vector.extract_strided_slice %6 {offsets = [8, 0], sizes = [8, 32], strides = [1, 1]} : vector<32x32xf32> to vector<8x32xf32>
    %cst_44 = arith.constant dense<0.000000e+00> : vector<8x32xf32>
    %129 = tpu.matmul %127, %128, %cst_44 {dimension_numbers = #tpu.dot_dimension_numbers<[1], [0], [0], [1], [0, 0, 1, 1], [], []>} : vector<8x8xf32>, vector<8x32xf32>, vector<8x32xf32> -> vector<8x32xf32>
    %130 = arith.addf %110, %129 : vector<8x32xf32>
    %131 = vector.extract_strided_slice %89 {offsets = [0, 16], sizes = [8, 8], strides = [1, 1]} : vector<8x96xf32> to vector<8x8xf32>
    %cst_45 = arith.constant 0.353553385 : f32
    %132 = vector.broadcast %cst_45 : f32 to vector<8x8xf32>
    %133 = arith.mulf %131, %132 : vector<8x8xf32>
    %134 = vector.extract_strided_slice %89 {offsets = [0, 48], sizes = [8, 8], strides = [1, 1]} : vector<8x96xf32> to vector<8x8xf32>
    %135 = vector.extract_strided_slice %89 {offsets = [0, 80], sizes = [8, 8], strides = [1, 1]} : vector<8x96xf32> to vector<8x8xf32>
    %cst_46 = arith.constant dense<0.000000e+00> : vector<8x8xf32>
    %136 = tpu.matmul %133, %134, %cst_46 {dimension_numbers = #tpu.dot_dimension_numbers<[1], [1], [0], [0], [0, 0, 1, 0], [], []>} : vector<8x8xf32>, vector<8x8xf32>, vector<8x8xf32> -> vector<8x8xf32>
    %cst_47 = arith.constant dense<0xFF800000> : vector<8xf32>
    %137 = vector.multi_reduction <maximumf>, %136, %cst_47 [1] : vector<8x8xf32> to vector<8xf32>
    %138 = vector.shape_cast %137 : vector<8xf32> to vector<8x1xf32>
    %139 = vector.broadcast %138 : vector<8x1xf32> to vector<8x8xf32>
    %140 = arith.subf %136, %139 : vector<8x8xf32>
    %141 = math.exp %140 : vector<8x8xf32>
    %cst_48 = arith.constant dense<0.000000e+00> : vector<8xf32>
    %142 = vector.multi_reduction <add>, %141, %cst_48 [1] : vector<8x8xf32> to vector<8xf32>
    %143 = vector.shape_cast %142 : vector<8xf32> to vector<8x1xf32>
    %144 = tpu.reciprocal %143 {approx = true} : vector<8x1xf32> -> vector<8x1xf32>
    %145 = vector.broadcast %144 : vector<8x1xf32> to vector<8x8xf32>
    %146 = arith.mulf %141, %145 : vector<8x8xf32>
    %cst_49 = arith.constant dense<0.000000e+00> : vector<8x8xf32>
    %147 = tpu.matmul %146, %135, %cst_49 {dimension_numbers = #tpu.dot_dimension_numbers<[1], [0], [0], [1], [0, 0, 1, 1], [], []>} : vector<8x8xf32>, vector<8x8xf32>, vector<8x8xf32> -> vector<8x8xf32>
    %148 = vector.extract_strided_slice %6 {offsets = [16, 0], sizes = [8, 32], strides = [1, 1]} : vector<32x32xf32> to vector<8x32xf32>
    %cst_50 = arith.constant dense<0.000000e+00> : vector<8x32xf32>
    %149 = tpu.matmul %147, %148, %cst_50 {dimension_numbers = #tpu.dot_dimension_numbers<[1], [0], [0], [1], [0, 0, 1, 1], [], []>} : vector<8x8xf32>, vector<8x32xf32>, vector<8x32xf32> -> vector<8x32xf32>
    %150 = arith.addf %130, %149 : vector<8x32xf32>
    %151 = vector.extract_strided_slice %89 {offsets = [0, 24], sizes = [8, 8], strides = [1, 1]} : vector<8x96xf32> to vector<8x8xf32>
    %cst_51 = arith.constant 0.353553385 : f32
    %152 = vector.broadcast %cst_51 : f32 to vector<8x8xf32>
    %153 = arith.mulf %151, %152 : vector<8x8xf32>
    %154 = vector.extract_strided_slice %89 {offsets = [0, 56], sizes = [8, 8], strides = [1, 1]} : vector<8x96xf32> to vector<8x8xf32>
    %155 = vector.extract_strided_slice %89 {offsets = [0, 88], sizes = [8, 8], strides = [1, 1]} : vector<8x96xf32> to vector<8x8xf32>
    %cst_52 = arith.constant dense<0.000000e+00> : vector<8x8xf32>
    %156 = tpu.matmul %153, %154, %cst_52 {dimension_numbers = #tpu.dot_dimension_numbers<[1], [1], [0], [0], [0, 0, 1, 0], [], []>} : vector<8x8xf32>, vector<8x8xf32>, vector<8x8xf32> -> vector<8x8xf32>
    %cst_53 = arith.constant dense<0xFF800000> : vector<8xf32>
    %157 = vector.multi_reduction <maximumf>, %156, %cst_53 [1] : vector<8x8xf32> to vector<8xf32>
    %158 = vector.shape_cast %157 : vector<8xf32> to vector<8x1xf32>
    %159 = vector.broadcast %158 : vector<8x1xf32> to vector<8x8xf32>
    %160 = arith.subf %156, %159 : vector<8x8xf32>
    %161 = math.exp %160 : vector<8x8xf32>
    %cst_54 = arith.constant dense<0.000000e+00> : vector<8xf32>
    %162 = vector.multi_reduction <add>, %161, %cst_54 [1] : vector<8x8xf32> to vector<8xf32>
    %163 = vector.shape_cast %162 : vector<8xf32> to vector<8x1xf32>
    %164 = tpu.reciprocal %163 {approx = true} : vector<8x1xf32> -> vector<8x1xf32>
    %165 = vector.broadcast %164 : vector<8x1xf32> to vector<8x8xf32>
    %166 = arith.mulf %161, %165 : vector<8x8xf32>
    %cst_55 = arith.constant dense<0.000000e+00> : vector<8x8xf32>
    %167 = tpu.matmul %166, %155, %cst_55 {dimension_numbers = #tpu.dot_dimension_numbers<[1], [0], [0], [1], [0, 0, 1, 1], [], []>} : vector<8x8xf32>, vector<8x8xf32>, vector<8x8xf32> -> vector<8x8xf32>
    %168 = vector.extract_strided_slice %6 {offsets = [24, 0], sizes = [8, 32], strides = [1, 1]} : vector<32x32xf32> to vector<8x32xf32>
    %cst_56 = arith.constant dense<0.000000e+00> : vector<8x32xf32>
    %169 = tpu.matmul %167, %168, %cst_56 {dimension_numbers = #tpu.dot_dimension_numbers<[1], [0], [0], [1], [0, 0, 1, 1], [], []>} : vector<8x8xf32>, vector<8x32xf32>, vector<8x32xf32> -> vector<8x32xf32>
    %170 = arith.addf %150, %169 : vector<8x32xf32>
    %171 = tpu.concatenate %88, %170 in 0 : vector<8x32xf32>, vector<8x32xf32> -> vector<16x32xf32>
    %c0_57 = arith.constant 0 : index
    %c0_58 = arith.constant 0 : index
    %172 = vector.load %arg5[%c0_57, %c0_58] : memref<1x32xf32, #tpu.memory_space<vmem>>, vector<1x32xf32>
    %173 = vector.broadcast %172 : vector<1x32xf32> to vector<16x32xf32>
    %174 = arith.addf %171, %173 : vector<16x32xf32>
    %175 = arith.addf %0, %174 : vector<16x32xf32>
    %cst_59 = arith.constant dense<0.000000e+00> : vector<16xf32>
    %176 = vector.multi_reduction <add>, %175, %cst_59 [1] : vector<16x32xf32> to vector<16xf32>
    %177 = vector.shape_cast %176 : vector<16xf32> to vector<16x1xf32>
    %cst_60 = arith.constant 3.200000e+01 : f32
    %178 = vector.broadcast %cst_60 : f32 to vector<16x1xf32>
    %179 = arith.divf %177, %178 : vector<16x1xf32>
    %180 = vector.broadcast %179 : vector<16x1xf32> to vector<16x32xf32>
    %181 = arith.subf %175, %180 : vector<16x32xf32>
    %182 = arith.mulf %181, %181 : vector<16x32xf32>
    %cst_61 = arith.constant dense<0.000000e+00> : vector<16xf32>
    %183 = vector.multi_reduction <add>, %182, %cst_61 [1] : vector<16x32xf32> to vector<16xf32>
    %184 = vector.shape_cast %183 : vector<16xf32> to vector<16x1xf32>
    %cst_62 = arith.constant 3.200000e+01 : f32
    %185 = vector.broadcast %cst_62 : f32 to vector<16x1xf32>
    %186 = arith.divf %184, %185 : vector<16x1xf32>
    %187 = vector.broadcast %179 : vector<16x1xf32> to vector<16x32xf32>
    %188 = arith.subf %175, %187 : vector<16x32xf32>
    %cst_63 = arith.constant 9.99999974E-6 : f32
    %189 = vector.broadcast %cst_63 : f32 to vector<16x1xf32>
    %190 = arith.addf %186, %189 : vector<16x1xf32>
    %191 = math.rsqrt %190 : vector<16x1xf32>
    %192 = vector.broadcast %191 : vector<16x1xf32> to vector<16x32xf32>
    %193 = arith.mulf %188, %192 : vector<16x32xf32>
    %c0_64 = arith.constant 0 : index
    %c0_65 = arith.constant 0 : index
    %194 = vector.load %arg10[%c0_64, %c0_65] : memref<1x32xf32, #tpu.memory_space<vmem>>, vector<1x32xf32>
    %195 = vector.broadcast %194 : vector<1x32xf32> to vector<16x32xf32>
    %196 = arith.mulf %193, %195 : vector<16x32xf32>
    %c0_66 = arith.constant 0 : index
    %c0_67 = arith.constant 0 : index
    %197 = vector.load %arg11[%c0_66, %c0_67] : memref<1x32xf32, #tpu.memory_space<vmem>>, vector<1x32xf32>
    %198 = vector.broadcast %197 : vector<1x32xf32> to vector<16x32xf32>
    %199 = arith.addf %196, %198 : vector<16x32xf32>
    %c0_68 = arith.constant 0 : index
    %c0_69 = arith.constant 0 : index
    %200 = vector.load %arg6[%c0_68, %c0_69] : memref<32x64xf32, #tpu.memory_space<vmem>>, vector<32x64xf32>
    %cst_70 = arith.constant dense<0.000000e+00> : vector<16x64xf32>
    %201 = tpu.matmul %199, %200, %cst_70 {dimension_numbers = #tpu.dot_dimension_numbers<[1], [0], [0], [1], [0, 0, 1, 1], [], []>} : vector<16x32xf32>, vector<32x64xf32>, vector<16x64xf32> -> vector<16x64xf32>
    %c0_71 = arith.constant 0 : index
    %c0_72 = arith.constant 0 : index
    %202 = vector.load %arg7[%c0_71, %c0_72] : memref<1x64xf32, #tpu.memory_space<vmem>>, vector<1x64xf32>
    %203 = vector.broadcast %202 : vector<1x64xf32> to vector<16x64xf32>
    %204 = arith.addf %201, %203 : vector<16x64xf32>
    %cst_73 = arith.constant 0.000000e+00 : f32
    %205 = vector.broadcast %cst_73 : f32 to vector<16x64xf32>
    %206 = arith.maximumf %204, %205 : vector<16x64xf32>
    %c0_74 = arith.constant 0 : index
    %c0_75 = arith.constant 0 : index
    %207 = vector.load %arg8[%c0_74, %c0_75] : memref<64x32xf32, #tpu.memory_space<vmem>>, vector<64x32xf32>
    %cst_76 = arith.constant dense<0.000000e+00> : vector<16x32xf32>
    %208 = tpu.matmul %206, %207, %cst_76 {dimension_numbers = #tpu.dot_dimension_numbers<[1], [0], [0], [1], [0, 0, 1, 1], [], []>} : vector<16x64xf32>, vector<64x32xf32>, vector<16x32xf32> -> vector<16x32xf32>
    %c0_77 = arith.constant 0 : index
    %c0_78 = arith.constant 0 : index
    %209 = vector.load %arg9[%c0_77, %c0_78] : memref<1x32xf32, #tpu.memory_space<vmem>>, vector<1x32xf32>
    %210 = vector.broadcast %209 : vector<1x32xf32> to vector<16x32xf32>
    %211 = arith.addf %208, %210 : vector<16x32xf32>
    %212 = arith.addf %199, %211 : vector<16x32xf32>
    %cst_79 = arith.constant dense<0.000000e+00> : vector<16xf32>
    %213 = vector.multi_reduction <add>, %212, %cst_79 [1] : vector<16x32xf32> to vector<16xf32>
    %214 = vector.shape_cast %213 : vector<16xf32> to vector<16x1xf32>
    %cst_80 = arith.constant 3.200000e+01 : f32
    %215 = vector.broadcast %cst_80 : f32 to vector<16x1xf32>
    %216 = arith.divf %214, %215 : vector<16x1xf32>
    %217 = vector.broadcast %216 : vector<16x1xf32> to vector<16x32xf32>
    %218 = arith.subf %212, %217 : vector<16x32xf32>
    %219 = arith.mulf %218, %218 : vector<16x32xf32>
    %cst_81 = arith.constant dense<0.000000e+00> : vector<16xf32>
    %220 = vector.multi_reduction <add>, %219, %cst_81 [1] : vector<16x32xf32> to vector<16xf32>
    %221 = vector.shape_cast %220 : vector<16xf32> to vector<16x1xf32>
    %cst_82 = arith.constant 3.200000e+01 : f32
    %222 = vector.broadcast %cst_82 : f32 to vector<16x1xf32>
    %223 = arith.divf %221, %222 : vector<16x1xf32>
    %224 = vector.broadcast %216 : vector<16x1xf32> to vector<16x32xf32>
    %225 = arith.subf %212, %224 : vector<16x32xf32>
    %cst_83 = arith.constant 9.99999974E-6 : f32
    %226 = vector.broadcast %cst_83 : f32 to vector<16x1xf32>
    %227 = arith.addf %223, %226 : vector<16x1xf32>
    %228 = math.rsqrt %227 : vector<16x1xf32>
    %229 = vector.broadcast %228 : vector<16x1xf32> to vector<16x32xf32>
    %230 = arith.mulf %225, %229 : vector<16x32xf32>
    %c0_84 = arith.constant 0 : index
    %c0_85 = arith.constant 0 : index
    %231 = vector.load %arg12[%c0_84, %c0_85] : memref<1x32xf32, #tpu.memory_space<vmem>>, vector<1x32xf32>
    %232 = vector.broadcast %231 : vector<1x32xf32> to vector<16x32xf32>
    %233 = arith.mulf %230, %232 : vector<16x32xf32>
    %c0_86 = arith.constant 0 : index
    %c0_87 = arith.constant 0 : index
    %234 = vector.load %arg13[%c0_86, %c0_87] : memref<1x32xf32, #tpu.memory_space<vmem>>, vector<1x32xf32>
    %235 = vector.broadcast %234 : vector<1x32xf32> to vector<16x32xf32>
    %236 = arith.addf %233, %235 : vector<16x32xf32>
    %c0_88 = arith.constant 0 : index
    %c0_89 = arith.constant 0 : index
    %237 = vector.load %arg14[%c0_88, %c0_89] : memref<16x32xf32, #tpu.memory_space<vmem>>, vector<16x32xf32>
    tpu.vector_store %arg14[%c0_88, %c0_89], %236 {strides = array<i32>} : memref<16x32xf32, #tpu.memory_space<vmem>>, vector<16x32xf32>,
    return
  }
  func.func @transform_0(%arg0: i32) -> (i32, i32) {
    %c0_i32 = arith.constant 0 : i32
    %c0_i32_0 = arith.constant 0 : i32
    %c0_i32_1 = arith.constant 0 : i32
    return %c0_i32, %c0_i32_0 : i32, i32
  }
  func.func @transform_1(%arg0: i32) -> (i32, i32) {
    %c0_i32 = arith.constant 0 : i32
    %c0_i32_0 = arith.constant 0 : i32
    %c0_i32_1 = arith.constant 0 : i32
    return %c0_i32, %c0_i32_0 : i32, i32
  }
  func.func @transform_2(%arg0: i32) -> (i32, i32) {
    %c0_i32 = arith.constant 0 : i32
    %c0_i32_0 = arith.constant 0 : i32
    %c0_i32_1 = arith.constant 0 : i32
    return %c0_i32, %c0_i32_0 : i32, i32
  }
  func.func @transform_3(%arg0: i32) -> (i32, i32) {
    %c0_i32 = arith.constant 0 : i32
    %c0_i32_0 = arith.constant 0 : i32
    %c0_i32_1 = arith.constant 0 : i32
    return %c0_i32, %c0_i32_0 : i32, i32
  }
  func.func @transform_4(%arg0: i32) -> (i32, i32) {
    %c0_i32 = arith.constant 0 : i32
    %c0_i32_0 = arith.constant 0 : i32
    %c0_i32_1 = arith.constant 0 : i32
    return %c0_i32, %c0_i32_0 : i32, i32
  }
  func.func @transform_5(%arg0: i32) -> (i32, i32) {
    %c0_i32 = arith.constant 0 : i32
    %c0_i32_0 = arith.constant 0 : i32
    %c0_i32_1 = arith.constant 0 : i32
    return %c0_i32, %c0_i32_0 : i32, i32
  }
  func.func @transform_6(%arg0: i32) -> (i32, i32) {
    %c0_i32 = arith.constant 0 : i32
    %c0_i32_0 = arith.constant 0 : i32
    %c0_i32_1 = arith.constant 0 : i32
    return %c0_i32, %c0_i32_0 : i32, i32
  }
  func.func @transform_7(%arg0: i32) -> (i32, i32) {
    %c0_i32 = arith.constant 0 : i32
    %c0_i32_0 = arith.constant 0 : i32
    %c0_i32_1 = arith.constant 0 : i32
    return %c0_i32, %c0_i32_0 : i32, i32
  }
  func.func @transform_8(%arg0: i32) -> (i32, i32) {
    %c0_i32 = arith.constant 0 : i32
    %c0_i32_0 = arith.constant 0 : i32
    %c0_i32_1 = arith.constant 0 : i32
    return %c0_i32, %c0_i32_0 : i32, i32
  }
  func.func @transform_9(%arg0: i32) -> (i32, i32) {
    %c0_i32 = arith.constant 0 : i32
    %c0_i32_0 = arith.constant 0 : i32
    %c0_i32_1 = arith.constant 0 : i32
    return %c0_i32, %c0_i32_0 : i32, i32
  }
  func.func @transform_10(%arg0: i32) -> (i32, i32) {
    %c0_i32 = arith.constant 0 : i32
    %c0_i32_0 = arith.constant 0 : i32
    %c0_i32_1 = arith.constant 0 : i32
    return %c0_i32, %c0_i32_0 : i32, i32
  }
  func.func @transform_11(%arg0: i32) -> (i32, i32) {
    %c0_i32 = arith.constant 0 : i32
    %c0_i32_0 = arith.constant 0 : i32
    %c0_i32_1 = arith.constant 0 : i32
    return %c0_i32, %c0_i32_0 : i32, i32
  }
  func.func @transform_12(%arg0: i32) -> (i32, i32) {
    %c0_i32 = arith.constant 0 : i32
    %c0_i32_0 = arith.constant 0 : i32
    %c0_i32_1 = arith.constant 0 : i32
    return %c0_i32, %c0_i32_0 : i32, i32
  }
  func.func @transform_13(%arg0: i32) -> (i32, i32) {
    %c0_i32 = arith.constant 0 : i32
    %c0_i32_0 = arith.constant 0 : i32
    %c0_i32_1 = arith.constant 0 : i32
    return %c0_i32, %c0_i32_0 : i32, i32
  }
}

</mosaic_0001>

<llo_original>
// kernel: transformer_encoder_layer.1
$region0: #{transformer_encoder_layer.1}
  #allocation0 [shape = 'u32[]', space=smem, size = 0x4, offset = 0x4, fixed_abs, tag = 'smem constant byte address 0x4 - core index']
  #allocation1 [shape = 'u32[144,128]{1,0:T(1,128)}', space=vmem, size = 0x12000, scoped, tag = 'internal scratch']
  %s0 = inlined_call_operand.vmem [shape: f32[16,32], index: 0, kind: input, shape index: {}]
  %s1 = inlined_call_operand.vmem [shape: f32[32,96], index: 1, kind: input, shape index: {}]
  %s2 = inlined_call_operand.vmem [shape: f32[1,96], index: 2, kind: input, shape index: {}]
  %s3 = inlined_call_operand.vmem [shape: f32[32,32], index: 3, kind: input, shape index: {}]
  %s4 = inlined_call_operand.vmem [shape: f32[1,32], index: 4, kind: input, shape index: {}]
  %s5 = inlined_call_operand.vmem [shape: f32[32,64], index: 5, kind: input, shape index: {}]
  %s6 = inlined_call_operand.vmem [shape: f32[1,64], index: 6, kind: input, shape index: {}]
  %s7 = inlined_call_operand.vmem [shape: f32[64,32], index: 7, kind: input, shape index: {}]
  %s8 = inlined_call_operand.vmem [shape: f32[1,32], index: 8, kind: input, shape index: {}]
  %s9 = inlined_call_operand.vmem [shape: f32[1,32], index: 9, kind: input, shape index: {}]
  %s10 = inlined_call_operand.vmem [shape: f32[1,32], index: 10, kind: input, shape index: {}]
  %s11 = inlined_call_operand.vmem [shape: f32[1,32], index: 11, kind: input, shape index: {}]
  %s12 = inlined_call_operand.vmem [shape: f32[1,32], index: 12, kind: input, shape index: {}]
  %s13 = inlined_call_operand.vmem [shape: f32[16,32], index: 13, kind: output, shape index: {}]
  %s14 = sld [smem:[#allocation0]]
  $region62: #{transformer_encoder_layer.1} parent=0
    _
  %s16 = ssub.s32 1, %s14
  %s17 = scalar_select 0, %s16, %s14
  // Predicated region
  $region2: #{transformer_encoder_layer.1} parent=0 // pred_check
    _
  $region3: #{transformer_encoder_layer.1} parent=0 // pred_check_branch
    %19 = sbr.rel (0) target = $region5
  $region4: #{transformer_encoder_layer.1} parent=0 // pred_region
    _
  $region5: #{transformer_encoder_layer.1} parent=0 // pred_fallthru
    _
  // Predicated region
  $region6: #{transformer_encoder_layer.1} parent=0 // pred_check
    _
  $region7: #{transformer_encoder_layer.1} parent=0 // pred_check_branch
    %21 = sbr.rel (0) target = $region9
  $region8: #{transformer_encoder_layer.1} parent=0 // pred_region
    _
  $region9: #{transformer_encoder_layer.1} parent=0 // pred_fallthru
    _
  // Predicated region
  $region10: #{transformer_encoder_layer.1} parent=0 // pred_check
    _
  $region11: #{transformer_encoder_layer.1} parent=0 // pred_check_branch
    %23 = sbr.rel (0) target = $region13
  $region12: #{transformer_encoder_layer.1} parent=0 // pred_region
    _
  $region13: #{transformer_encoder_layer.1} parent=0 // pred_fallthru
    _
  // Predicated region
  $region14: #{transformer_encoder_layer.1} parent=0 // pred_check
    _
  $region15: #{transformer_encoder_layer.1} parent=0 // pred_check_branch
    %25 = sbr.rel (0) target = $region17
  $region16: #{transformer_encoder_layer.1} parent=0 // pred_region
    _
  $region17: #{transformer_encoder_layer.1} parent=0 // pred_fallthru
    _
  // Predicated region
  $region18: #{transformer_encoder_layer.1} parent=0 // pred_check
    _
  $region19: #{transformer_encoder_layer.1} parent=0 // pred_check_branch
    %27 = sbr.rel (0) target = $region21
  $region20: #{transformer_encoder_layer.1} parent=0 // pred_region
    _
  $region21: #{transformer_encoder_layer.1} parent=0 // pred_fallthru
    _
  // Predicated region
  $region22: #{transformer_encoder_layer.1} parent=0 // pred_check
    _
  $region23: #{transformer_encoder_layer.1} parent=0 // pred_check_branch
    %29 = sbr.rel (0) target = $region25
  $region24: #{transformer_encoder_layer.1} parent=0 // pred_region
    _
  $region25: #{transformer_encoder_layer.1} parent=0 // pred_fallthru
    _
  // Predicated region
  $region26: #{transformer_encoder_layer.1} parent=0 // pred_check
    _
  $region27: #{transformer_encoder_layer.1} parent=0 // pred_check_branch
    %31 = sbr.rel (0) target = $region29
  $region28: #{transformer_encoder_layer.1} parent=0 // pred_region
    _
  $region29: #{transformer_encoder_layer.1} parent=0 // pred_fallthru
    _
  // Predicated region
  $region30: #{transformer_encoder_layer.1} parent=0 // pred_check
    _
  $region31: #{transformer_encoder_layer.1} parent=0 // pred_check_branch
    %33 = sbr.rel (0) target = $region33
  $region32: #{transformer_encoder_layer.1} parent=0 // pred_region
    _
  $region33: #{transformer_encoder_layer.1} parent=0 // pred_fallthru
    _
  // Predicated region
  $region34: #{transformer_encoder_layer.1} parent=0 // pred_check
    _
  $region35: #{transformer_encoder_layer.1} parent=0 // pred_check_branch
    %35 = sbr.rel (0) target = $region37
  $region36: #{transformer_encoder_layer.1} parent=0 // pred_region
    _
  $region37: #{transformer_encoder_layer.1} parent=0 // pred_fallthru
    _
  // Predicated region
  $region38: #{transformer_encoder_layer.1} parent=0 // pred_check
    _
  $region39: #{transformer_encoder_layer.1} parent=0 // pred_check_branch
    %37 = sbr.rel (0) target = $region41
  $region40: #{transformer_encoder_layer.1} parent=0 // pred_region
    _
  $region41: #{transformer_encoder_layer.1} parent=0 // pred_fallthru
    _
  // Predicated region
  $region42: #{transformer_encoder_layer.1} parent=0 // pred_check
    _
  $region43: #{transformer_encoder_layer.1} parent=0 // pred_check_branch
    %39 = sbr.rel (0) target = $region45
  $region44: #{transformer_encoder_layer.1} parent=0 // pred_region
    _
  $region45: #{transformer_encoder_layer.1} parent=0 // pred_fallthru
    _
  // Predicated region
  $region46: #{transformer_encoder_layer.1} parent=0 // pred_check
    _
  $region47: #{transformer_encoder_layer.1} parent=0 // pred_check_branch
    %41 = sbr.rel (0) target = $region49
  $region48: #{transformer_encoder_layer.1} parent=0 // pred_region
    _
  $region49: #{transformer_encoder_layer.1} parent=0 // pred_fallthru
    _
  // Predicated region
  $region50: #{transformer_encoder_layer.1} parent=0 // pred_check
    _
  $region51: #{transformer_encoder_layer.1} parent=0 // pred_check_branch
    %43 = sbr.rel (0) target = $region53
  $region52: #{transformer_encoder_layer.1} parent=0 // pred_region
    _
  $region53: #{transformer_encoder_layer.1} parent=0 // pred_fallthru
    _
  %v44 = vld [vmem:[%s0] sm:$0xff]
  %v45 = vld [vmem:[%s0 + $0x8] sm:$0xff]
  %v46 = vld [vmem:[%s1] sm:$0xff]
  %v47 = vld [vmem:[%s1 + $0x8] sm:$0xff]
  %v48 = vld [vmem:[%s1 + $0x10] sm:$0xff]
  %v49 = vld [vmem:[%s1 + $0x18] sm:$0xff]
  %v50 = vld [vmem:[%s2] sm:$0x1]
  %v52 = vlaneseq
  %v53 = vshrl.u32 %v52, 7
  %v54 = vsub.s32 0, %v53
  %v55 = vrot.slane %v50, %v54
  %vm57 = vcmask 261120
  %v59 = vsel %vm57, %v44, 0
  %v62 = vsel %vm57, %v45, 0
  %64 = vmatprep.subr.mxu0 0.0
  %65 = vmatpush1.msra.mxu0 0.0
  %66 = vmatprep.subr.mxu0 0.0
  %67 = vmatpush1.msra.mxu0 0.0
  %68 = vmatprep.subr.mxu0 0.0
  %69 = vmatpush1.msra.mxu0 0.0
  %70 = vmatprep.subr.mxu0 0.0
  %71 = vmatpush1.msra.mxu0 0.0
  %72 = vmatprep.subr.mxu0 0.0
  %73 = vmatpush1.msra.mxu0 0.0
  %74 = vmatprep.subr.mxu0 0.0
  %75 = vmatpush1.msra.mxu0 0.0
  %76 = vmatprep.subr.mxu0 0.0
  %77 = vmatpush1.msra.mxu0 0.0
  %78 = vmatprep.subr.mxu0 0.0
  %79 = vmatpush1.msra.mxu0 0.0
  %80 = vmatprep.subr.mxu0 0.0
  %81 = vmatpush1.msra.mxu0 0.0
  %82 = vmatprep.subr.mxu0 0.0
  %83 = vmatpush1.msra.mxu0 0.0
  %84 = vmatprep.subr.mxu0 0.0
  %85 = vmatpush1.msra.mxu0 0.0
  %86 = vmatprep.subr.mxu0 0.0
  %87 = vmatpush1.msra.mxu0 0.0
  %88 = vmatprep.subr.mxu0 0.0
  %89 = vmatpush1.msra.mxu0 %v49
  %90 = vmatprep.subr.mxu0 0.0
  %91 = vmatpush1.msra.mxu0 %v48
  %92 = vmatprep.subr.mxu0 0.0
  %93 = vmatpush1.msra.mxu0 %v47
  %94 = vmatprep.subr.mxu0 0.0
  %95 = vmatpush1.msra.mxu0 %v46
  %96 = vmatprep.subr.mxu0 0.0
  %97 = vmatpush2.msra.mxu0 0.0
  %98 = vmatprep.subr.mxu0 0.0
  %99 = vmatpush2.msra.mxu0 0.0
  %100 = vmatprep.subr.mxu0 0.0
  %101 = vmatpush2.msra.mxu0 0.0
  %102 = vmatprep.subr.mxu0 0.0
  %103 = vmatpush2.msra.mxu0 0.0
  %104 = vmatprep.subr.mxu0 0.0
  %105 = vmatpush2.msra.mxu0 0.0
  %106 = vmatprep.subr.mxu0 0.0
  %107 = vmatpush2.msra.mxu0 0.0
  %108 = vmatprep.subr.mxu0 0.0
  %109 = vmatpush2.msra.mxu0 0.0
  %110 = vmatprep.subr.mxu0 0.0
  %111 = vmatpush2.msra.mxu0 0.0
  %112 = vmatprep.subr.mxu0 0.0
  %113 = vmatpush2.msra.mxu0 0.0
  %114 = vmatprep.subr.mxu0 0.0
  %115 = vmatpush2.msra.mxu0 0.0
  %116 = vmatprep.subr.mxu0 0.0
  %117 = vmatpush2.msra.mxu0 0.0
  %118 = vmatprep.subr.mxu0 0.0
  %119 = vmatpush2.msra.mxu0 0.0
  %120 = vmatprep.subr.mxu0 0.0
  %121 = vmatpush2.msra.mxu0 0.0
  %122 = vmatprep.subr.mxu0 0.0
  %123 = vmatpush2.msra.mxu0 0.0
  %124 = vmatprep.subr.mxu0 0.0
  %125 = vmatpush2.msra.mxu0 0.0
  %126 = vmatprep.subr.mxu0 0.0
  %127 = vmatpush2.msra.mxu0 0.0
  %128 = vmatprep.mubr.f32.mxu0 0.0
  %129 = vmatmul.mubr.f32.gmra.mxu0 %v59
  %v130 = vpop.f32.mrf.mxu0
  %v131 = vadd.f32 %v55, %v130
  %v132 = vpop.f32.mrf.mxu0
  %133 = vmatprep.mubr.f32.mxu0 0.0
  %134 = vmatmul.mubr.f32.gmra.mxu0 %v62
  %v135 = vpop.f32.mrf.mxu0
  %v136 = vadd.f32 %v55, %v135
  %v137 = vpop.f32.mrf.mxu0
  %138 = vdwg.mxu0
  %v139 = vld [vmem:[%s3] sm:$0xff]
  %v140 = vld [vmem:[%s3 + $0x8] sm:$0xff]
  %v141 = vld [vmem:[%s3 + $0x10] sm:$0xff]
  %v142 = vld [vmem:[%s3 + $0x18] sm:$0xff]
  %v143 = vmul.f32 %v131, 0.35355338
  %145 = vrot.lane.b32.xlu0 %v131, 96
  %v146 = vpop.permute.xlu0 %145
  %vm147 = vcmask 64512
  %v149 = vsel %vm147, %v143, 0
  %v151 = vsel %vm147, %v146, 0
  %153 = vmatprep.subr.mxu0 0.0
  %154 = vmatpush1.xpose.msra.mxu0 0.0
  %155 = vmatprep.subr.mxu0 0.0
  %156 = vmatpush1.xpose.msra.mxu0 0.0
  %157 = vmatprep.subr.mxu0 0.0
  %158 = vmatpush1.xpose.msra.mxu0 0.0
  %159 = vmatprep.subr.mxu0 0.0
  %160 = vmatpush1.xpose.msra.mxu0 0.0
  %161 = vmatprep.subr.mxu0 0.0
  %162 = vmatpush1.xpose.msra.mxu0 0.0
  %163 = vmatprep.subr.mxu0 0.0
  %164 = vmatpush1.xpose.msra.mxu0 0.0
  %165 = vmatprep.subr.mxu0 0.0
  %166 = vmatpush1.xpose.msra.mxu0 0.0
  %167 = vmatprep.subr.mxu0 0.0
  %168 = vmatpush1.xpose.msra.mxu0 0.0
  %169 = vmatprep.subr.mxu0 0.0
  %170 = vmatpush1.xpose.msra.mxu0 0.0
  %171 = vmatprep.subr.mxu0 0.0
  %172 = vmatpush1.xpose.msra.mxu0 0.0
  %173 = vmatprep.subr.mxu0 0.0
  %174 = vmatpush1.xpose.msra.mxu0 0.0
  %175 = vmatprep.subr.mxu0 0.0
  %176 = vmatpush1.xpose.msra.mxu0 0.0
  %177 = vmatprep.subr.mxu0 0.0
  %178 = vmatpush1.xpose.msra.mxu0 0.0
  %179 = vmatprep.subr.mxu0 0.0
  %180 = vmatpush1.xpose.msra.mxu0 0.0
  %181 = vmatprep.subr.mxu0 0.0
  %182 = vmatpush1.xpose.msra.mxu0 0.0
  %183 = vmatprep.subr.mxu0 0.0
  %184 = vmatpush1.xpose.msra.mxu0 %v151
  %185 = vmatprep.subr.mxu0 0.0
  %186 = vmatpush2.xpose.msra.mxu0 0.0
  %187 = vmatprep.subr.mxu0 0.0
  %188 = vmatpush2.xpose.msra.mxu0 0.0
  %189 = vmatprep.subr.mxu0 0.0
  %190 = vmatpush2.xpose.msra.mxu0 0.0
  %191 = vmatprep.subr.mxu0 0.0
  %192 = vmatpush2.xpose.msra.mxu0 0.0
  %193 = vmatprep.subr.mxu0 0.0
  %194 = vmatpush2.xpose.msra.mxu0 0.0
  %195 = vmatprep.subr.mxu0 0.0
  %196 = vmatpush2.xpose.msra.mxu0 0.0
  %197 = vmatprep.subr.mxu0 0.0
  %198 = vmatpush2.xpose.msra.mxu0 0.0
  %199 = vmatprep.subr.mxu0 0.0
  %200 = vmatpush2.xpose.msra.mxu0 0.0
  %201 = vmatprep.subr.mxu0 0.0
  %202 = vmatpush2.xpose.msra.mxu0 0.0
  %203 = vmatprep.subr.mxu0 0.0
  %204 = vmatpush2.xpose.msra.mxu0 0.0
  %205 = vmatprep.subr.mxu0 0.0
  %206 = vmatpush2.xpose.msra.mxu0 0.0
  %207 = vmatprep.subr.mxu0 0.0
  %208 = vmatpush2.xpose.msra.mxu0 0.0
  %209 = vmatprep.subr.mxu0 0.0
  %210 = vmatpush2.xpose.msra.mxu0 0.0
  %211 = vmatprep.subr.mxu0 0.0
  %212 = vmatpush2.xpose.msra.mxu0 0.0
  %213 = vmatprep.subr.mxu0 0.0
  %214 = vmatpush2.xpose.msra.mxu0 0.0
  %215 = vmatprep.subr.mxu0 0.0
  %216 = vmatpush2.xpose.msra.mxu0 0.0
  %217 = vmatprep.mubr.f32.mxu0 0.0
  %218 = vmatmul.mubr.f32.gmra.mxu0 %v149
  %v219 = vpop.f32.mrf.mxu0
  %v220 = vadd.f32 0.0, %v219
  %v221 = vpop.f32.mrf.mxu0
  %222 = vdwg.mxu0
  %v223 = vsel %vm147, %v220, -inf
  %224 = vmax.xlane.f32.xlu0 %v223
  %v225 = vpop.xlane.xlu0 %224
  %v226 = vsub.f32 %v220, %v225
  %v227 = vmul.f32 %v226, 1.442695
  %v228 = vpow.pop %v227
  %v229 = vsel %vm147, %v228, 0.0
  %230 = vadd.xlane.f32.xlu0 %v229
  %v231 = vpop.xlane.xlu0 %230
  %v232 = vrcp.pop %v231
  %v233 = vmul.f32 %v228, %v232
  %234 = vrot.lane.b32.xlu0 %v131, 64
  %v235 = vpop.permute.xlu0 %234
  %v238 = vsel %vm147, %v233, 0
  %240 = vmatprep.subr.mxu0 0.0
  %241 = vmatpush1.msra.mxu0 0.0
  %242 = vmatprep.subr.mxu0 0.0
  %243 = vmatpush1.msra.mxu0 0.0
  %244 = vmatprep.subr.mxu0 0.0
  %245 = vmatpush1.msra.mxu0 0.0
  %246 = vmatprep.subr.mxu0 0.0
  %247 = vmatpush1.msra.mxu0 0.0
  %248 = vmatprep.subr.mxu0 0.0
  %249 = vmatpush1.msra.mxu0 0.0
  %250 = vmatprep.subr.mxu0 0.0
  %251 = vmatpush1.msra.mxu0 0.0
  %252 = vmatprep.subr.mxu0 0.0
  %253 = vmatpush1.msra.mxu0 0.0
  %254 = vmatprep.subr.mxu0 0.0
  %255 = vmatpush1.msra.mxu0 0.0
  %256 = vmatprep.subr.mxu0 0.0
  %257 = vmatpush1.msra.mxu0 0.0
  %258 = vmatprep.subr.mxu0 0.0
  %259 = vmatpush1.msra.mxu0 0.0
  %260 = vmatprep.subr.mxu0 0.0
  %261 = vmatpush1.msra.mxu0 0.0
  %262 = vmatprep.subr.mxu0 0.0
  %263 = vmatpush1.msra.mxu0 0.0
  %264 = vmatprep.subr.mxu0 0.0
  %265 = vmatpush1.msra.mxu0 0.0
  %266 = vmatprep.subr.mxu0 0.0
  %267 = vmatpush1.msra.mxu0 0.0
  %268 = vmatprep.subr.mxu0 0.0
  %269 = vmatpush1.msra.mxu0 0.0
  %270 = vmatprep.subr.mxu0 0.0
  %271 = vmatpush1.msra.mxu0 %v235
  %272 = vmatprep.subr.mxu0 0.0
  %273 = vmatpush2.msra.mxu0 0.0
  %274 = vmatprep.subr.mxu0 0.0
  %275 = vmatpush2.msra.mxu0 0.0
  %276 = vmatprep.subr.mxu0 0.0
  %277 = vmatpush2.msra.mxu0 0.0
  %278 = vmatprep.subr.mxu0 0.0
  %279 = vmatpush2.msra.mxu0 0.0
  %280 = vmatprep.subr.mxu0 0.0
  %281 = vmatpush2.msra.mxu0 0.0
  %282 = vmatprep.subr.mxu0 0.0
  %283 = vmatpush2.msra.mxu0 0.0
  %284 = vmatprep.subr.mxu0 0.0
  %285 = vmatpush2.msra.mxu0 0.0
  %286 = vmatprep.subr.mxu0 0.0
  %287 = vmatpush2.msra.mxu0 0.0
  %288 = vmatprep.subr.mxu0 0.0
  %289 = vmatpush2.msra.mxu0 0.0
  %290 = vmatprep.subr.mxu0 0.0
  %291 = vmatpush2.msra.mxu0 0.0
  %292 = vmatprep.subr.mxu0 0.0
  %293 = vmatpush2.msra.mxu0 0.0
  %294 = vmatprep.subr.mxu0 0.0
  %295 = vmatpush2.msra.mxu0 0.0
  %296 = vmatprep.subr.mxu0 0.0
  %297 = vmatpush2.msra.mxu0 0.0
  %298 = vmatprep.subr.mxu0 0.0
  %299 = vmatpush2.msra.mxu0 0.0
  %300 = vmatprep.subr.mxu0 0.0
  %301 = vmatpush2.msra.mxu0 0.0
  %302 = vmatprep.subr.mxu0 0.0
  %303 = vmatpush2.msra.mxu0 0.0
  %304 = vmatprep.mubr.f32.mxu0 0.0
  %305 = vmatmul.mubr.f32.gmra.mxu0 %v238
  %v306 = vpop.f32.mrf.mxu0
  %v307 = vadd.f32 0.0, %v306
  %v308 = vpop.f32.mrf.mxu0
  %309 = vdwg.mxu0
  %310 = vrot.lane.b32.xlu0 %v143, 120
  %v311 = vpop.permute.xlu0 %310
  %312 = vrot.lane.b32.xlu0 %v131, 88
  %v313 = vpop.permute.xlu0 %312
  %v314 = vsel %vm147, %v311, 0
  %v316 = vsel %vm147, %v313, 0
  %318 = vmatprep.subr.mxu0 0.0
  %319 = vmatpush1.xpose.msra.mxu0 0.0
  %320 = vmatprep.subr.mxu0 0.0
  %321 = vmatpush1.xpose.msra.mxu0 0.0
  %322 = vmatprep.subr.mxu0 0.0
  %323 = vmatpush1.xpose.msra.mxu0 0.0
  %324 = vmatprep.subr.mxu0 0.0
  %325 = vmatpush1.xpose.msra.mxu0 0.0
  %326 = vmatprep.subr.mxu0 0.0
  %327 = vmatpush1.xpose.msra.mxu0 0.0
  %328 = vmatprep.subr.mxu0 0.0
  %329 = vmatpush1.xpose.msra.mxu0 0.0
  %330 = vmatprep.subr.mxu0 0.0
  %331 = vmatpush1.xpose.msra.mxu0 0.0
  %332 = vmatprep.subr.mxu0 0.0
  %333 = vmatpush1.xpose.msra.mxu0 0.0
  %334 = vmatprep.subr.mxu0 0.0
  %335 = vmatpush1.xpose.msra.mxu0 0.0
  %336 = vmatprep.subr.mxu0 0.0
  %337 = vmatpush1.xpose.msra.mxu0 0.0
  %338 = vmatprep.subr.mxu0 0.0
  %339 = vmatpush1.xpose.msra.mxu0 0.0
  %340 = vmatprep.subr.mxu0 0.0
  %341 = vmatpush1.xpose.msra.mxu0 0.0
  %342 = vmatprep.subr.mxu0 0.0
  %343 = vmatpush1.xpose.msra.mxu0 0.0
  %344 = vmatprep.subr.mxu0 0.0
  %345 = vmatpush1.xpose.msra.mxu0 0.0
  %346 = vmatprep.subr.mxu0 0.0
  %347 = vmatpush1.xpose.msra.mxu0 0.0
  %348 = vmatprep.subr.mxu0 0.0
  %349 = vmatpush1.xpose.msra.mxu0 %v316
  %350 = vmatprep.subr.mxu0 0.0
  %351 = vmatpush2.xpose.msra.mxu0 0.0
  %352 = vmatprep.subr.mxu0 0.0
  %353 = vmatpush2.xpose.msra.mxu0 0.0
  %354 = vmatprep.subr.mxu0 0.0
  %355 = vmatpush2.xpose.msra.mxu0 0.0
  %356 = vmatprep.subr.mxu0 0.0
  %357 = vmatpush2.xpose.msra.mxu0 0.0
  %358 = vmatprep.subr.mxu0 0.0
  %359 = vmatpush2.xpose.msra.mxu0 0.0
  %360 = vmatprep.subr.mxu0 0.0
  %361 = vmatpush2.xpose.msra.mxu0 0.0
  %362 = vmatprep.subr.mxu0 0.0
  %363 = vmatpush2.xpose.msra.mxu0 0.0
  %364 = vmatprep.subr.mxu0 0.0
  %365 = vmatpush2.xpose.msra.mxu0 0.0
  %366 = vmatprep.subr.mxu0 0.0
  %367 = vmatpush2.xpose.msra.mxu0 0.0
  %368 = vmatprep.subr.mxu0 0.0
  %369 = vmatpush2.xpose.msra.mxu0 0.0
  %370 = vmatprep.subr.mxu0 0.0
  %371 = vmatpush2.xpose.msra.mxu0 0.0
  %372 = vmatprep.subr.mxu0 0.0
  %373 = vmatpush2.xpose.msra.mxu0 0.0
  %374 = vmatprep.subr.mxu0 0.0
  %375 = vmatpush2.xpose.msra.mxu0 0.0
  %376 = vmatprep.subr.mxu0 0.0
  %377 = vmatpush2.xpose.msra.mxu0 0.0
  %378 = vmatprep.subr.mxu0 0.0
  %379 = vmatpush2.xpose.msra.mxu0 0.0
  %380 = vmatprep.subr.mxu0 0.0
  %381 = vmatpush2.xpose.msra.mxu0 0.0
  %382 = vmatprep.mubr.f32.mxu0 0.0
  %383 = vmatmul.mubr.f32.gmra.mxu0 %v314
  %v384 = vpop.f32.mrf.mxu0
  %v385 = vadd.f32 0.0, %v384
  %v386 = vpop.f32.mrf.mxu0
  %387 = vdwg.mxu0
  %v388 = vsel %vm147, %v385, -inf
  %389 = vmax.xlane.f32.xlu0 %v388
  %v390 = vpop.xlane.xlu0 %389
  %v391 = vsub.f32 %v385, %v390
  %v392 = vmul.f32 %v391, 1.442695
  %v393 = vpow.pop %v392
  %v394 = vsel %vm147, %v393, 0.0
  %395 = vadd.xlane.f32.xlu0 %v394
  %v396 = vpop.xlane.xlu0 %395
  %v397 = vrcp.pop %v396
  %v398 = vmul.f32 %v393, %v397
  %399 = vrot.lane.b32.xlu0 %v131, 56
  %v400 = vpop.permute.xlu0 %399
  %v403 = vsel %vm147, %v398, 0
  %405 = vmatprep.subr.mxu0 0.0
  %406 = vmatpush1.msra.mxu0 0.0
  %407 = vmatprep.subr.mxu0 0.0
  %408 = vmatpush1.msra.mxu0 0.0
  %409 = vmatprep.subr.mxu0 0.0
  %410 = vmatpush1.msra.mxu0 0.0
  %411 = vmatprep.subr.mxu0 0.0
  %412 = vmatpush1.msra.mxu0 0.0
  %413 = vmatprep.subr.mxu0 0.0
  %414 = vmatpush1.msra.mxu0 0.0
  %415 = vmatprep.subr.mxu0 0.0
  %416 = vmatpush1.msra.mxu0 0.0
  %417 = vmatprep.subr.mxu0 0.0
  %418 = vmatpush1.msra.mxu0 0.0
  %419 = vmatprep.subr.mxu0 0.0
  %420 = vmatpush1.msra.mxu0 0.0
  %421 = vmatprep.subr.mxu0 0.0
  %422 = vmatpush1.msra.mxu0 0.0
  %423 = vmatprep.subr.mxu0 0.0
  %424 = vmatpush1.msra.mxu0 0.0
  %425 = vmatprep.subr.mxu0 0.0
  %426 = vmatpush1.msra.mxu0 0.0
  %427 = vmatprep.subr.mxu0 0.0
  %428 = vmatpush1.msra.mxu0 0.0
  %429 = vmatprep.subr.mxu0 0.0
  %430 = vmatpush1.msra.mxu0 0.0
  %431 = vmatprep.subr.mxu0 0.0
  %432 = vmatpush1.msra.mxu0 0.0
  %433 = vmatprep.subr.mxu0 0.0
  %434 = vmatpush1.msra.mxu0 0.0
  %435 = vmatprep.subr.mxu0 0.0
  %436 = vmatpush1.msra.mxu0 %v400
  %437 = vmatprep.subr.mxu0 0.0
  %438 = vmatpush2.msra.mxu0 0.0
  %439 = vmatprep.subr.mxu0 0.0
  %440 = vmatpush2.msra.mxu0 0.0
  %441 = vmatprep.subr.mxu0 0.0
  %442 = vmatpush2.msra.mxu0 0.0
  %443 = vmatprep.subr.mxu0 0.0
  %444 = vmatpush2.msra.mxu0 0.0
  %445 = vmatprep.subr.mxu0 0.0
  %446 = vmatpush2.msra.mxu0 0.0
  %447 = vmatprep.subr.mxu0 0.0
  %448 = vmatpush2.msra.mxu0 0.0
  %449 = vmatprep.subr.mxu0 0.0
  %450 = vmatpush2.msra.mxu0 0.0
  %451 = vmatprep.subr.mxu0 0.0
  %452 = vmatpush2.msra.mxu0 0.0
  %453 = vmatprep.subr.mxu0 0.0
  %454 = vmatpush2.msra.mxu0 0.0
  %455 = vmatprep.subr.mxu0 0.0
  %456 = vmatpush2.msra.mxu0 0.0
  %457 = vmatprep.subr.mxu0 0.0
  %458 = vmatpush2.msra.mxu0 0.0
  %459 = vmatprep.subr.mxu0 0.0
  %460 = vmatpush2.msra.mxu0 0.0
  %461 = vmatprep.subr.mxu0 0.0
  %462 = vmatpush2.msra.mxu0 0.0
  %463 = vmatprep.subr.mxu0 0.0
  %464 = vmatpush2.msra.mxu0 0.0
  %465 = vmatprep.subr.mxu0 0.0
  %466 = vmatpush2.msra.mxu0 0.0
  %467 = vmatprep.subr.mxu0 0.0
  %468 = vmatpush2.msra.mxu0 0.0
  %469 = vmatprep.mubr.f32.mxu0 0.0
  %470 = vmatmul.mubr.f32.gmra.mxu0 %v403
  %v471 = vpop.f32.mrf.mxu0
  %v472 = vadd.f32 0.0, %v471
  %v473 = vpop.f32.mrf.mxu0
  %474 = vdwg.mxu0
  %v476 = vsel %vm147, %v472, 0
  %478 = vmatprep.subr.mxu0 0.0
  %479 = vmatpush1.msra.mxu0 0.0
  %480 = vmatprep.subr.mxu0 0.0
  %481 = vmatpush1.msra.mxu0 0.0
  %482 = vmatprep.subr.mxu0 0.0
  %483 = vmatpush1.msra.mxu0 0.0
  %484 = vmatprep.subr.mxu0 0.0
  %485 = vmatpush1.msra.mxu0 0.0
  %486 = vmatprep.subr.mxu0 0.0
  %487 = vmatpush1.msra.mxu0 0.0
  %488 = vmatprep.subr.mxu0 0.0
  %489 = vmatpush1.msra.mxu0 0.0
  %490 = vmatprep.subr.mxu0 0.0
  %491 = vmatpush1.msra.mxu0 0.0
  %492 = vmatprep.subr.mxu0 0.0
  %493 = vmatpush1.msra.mxu0 0.0
  %494 = vmatprep.subr.mxu0 0.0
  %495 = vmatpush1.msra.mxu0 0.0
  %496 = vmatprep.subr.mxu0 0.0
  %497 = vmatpush1.msra.mxu0 0.0
  %498 = vmatprep.subr.mxu0 0.0
  %499 = vmatpush1.msra.mxu0 0.0
  %500 = vmatprep.subr.mxu0 0.0
  %501 = vmatpush1.msra.mxu0 0.0
  %502 = vmatprep.subr.mxu0 0.0
  %503 = vmatpush1.msra.mxu0 0.0
  %504 = vmatprep.subr.mxu0 0.0
  %505 = vmatpush1.msra.mxu0 0.0
  %506 = vmatprep.subr.mxu0 0.0
  %507 = vmatpush1.msra.mxu0 0.0
  %508 = vmatprep.subr.mxu0 0.0
  %509 = vmatpush1.msra.mxu0 %v140
  %510 = vmatprep.subr.mxu0 0.0
  %511 = vmatpush2.msra.mxu0 0.0
  %512 = vmatprep.subr.mxu0 0.0
  %513 = vmatpush2.msra.mxu0 0.0
  %514 = vmatprep.subr.mxu0 0.0
  %515 = vmatpush2.msra.mxu0 0.0
  %516 = vmatprep.subr.mxu0 0.0
  %517 = vmatpush2.msra.mxu0 0.0
  %518 = vmatprep.subr.mxu0 0.0
  %519 = vmatpush2.msra.mxu0 0.0
  %520 = vmatprep.subr.mxu0 0.0
  %521 = vmatpush2.msra.mxu0 0.0
  %522 = vmatprep.subr.mxu0 0.0
  %523 = vmatpush2.msra.mxu0 0.0
  %524 = vmatprep.subr.mxu0 0.0
  %525 = vmatpush2.msra.mxu0 0.0
  %526 = vmatprep.subr.mxu0 0.0
  %527 = vmatpush2.msra.mxu0 0.0
  %528 = vmatprep.subr.mxu0 0.0
  %529 = vmatpush2.msra.mxu0 0.0
  %530 = vmatprep.subr.mxu0 0.0
  %531 = vmatpush2.msra.mxu0 0.0
  %532 = vmatprep.subr.mxu0 0.0
  %533 = vmatpush2.msra.mxu0 0.0
  %534 = vmatprep.subr.mxu0 0.0
  %535 = vmatpush2.msra.mxu0 0.0
  %536 = vmatprep.subr.mxu0 0.0
  %537 = vmatpush2.msra.mxu0 0.0
  %538 = vmatprep.subr.mxu0 0.0
  %539 = vmatpush2.msra.mxu0 0.0
  %540 = vmatprep.subr.mxu0 0.0
  %541 = vmatpush2.msra.mxu0 0.0
  %542 = vmatprep.mubr.f32.mxu0 0.0
  %543 = vmatmul.mubr.f32.gmra.mxu0 %v476
  %v544 = vpop.f32.mrf.mxu0
  %v545 = vadd.f32 0.0, %v544
  %v546 = vpop.f32.mrf.mxu0
  %547 = vdwg.mxu0
  %v549 = vsel %vm147, %v307, 0
  %551 = vmatprep.subr.mxu0 0.0
  %552 = vmatpush1.msra.mxu0 0.0
  %553 = vmatprep.subr.mxu0 0.0
  %554 = vmatpush1.msra.mxu0 0.0
  %555 = vmatprep.subr.mxu0 0.0
  %556 = vmatpush1.msra.mxu0 0.0
  %557 = vmatprep.subr.mxu0 0.0
  %558 = vmatpush1.msra.mxu0 0.0
  %559 = vmatprep.subr.mxu0 0.0
  %560 = vmatpush1.msra.mxu0 0.0
  %561 = vmatprep.subr.mxu0 0.0
  %562 = vmatpush1.msra.mxu0 0.0
  %563 = vmatprep.subr.mxu0 0.0
  %564 = vmatpush1.msra.mxu0 0.0
  %565 = vmatprep.subr.mxu0 0.0
  %566 = vmatpush1.msra.mxu0 0.0
  %567 = vmatprep.subr.mxu0 0.0
  %568 = vmatpush1.msra.mxu0 0.0
  %569 = vmatprep.subr.mxu0 0.0
  %570 = vmatpush1.msra.mxu0 0.0
  %571 = vmatprep.subr.mxu0 0.0
  %572 = vmatpush1.msra.mxu0 0.0
  %573 = vmatprep.subr.mxu0 0.0
  %574 = vmatpush1.msra.mxu0 0.0
  %575 = vmatprep.subr.mxu0 0.0
  %576 = vmatpush1.msra.mxu0 0.0
  %577 = vmatprep.subr.mxu0 0.0
  %578 = vmatpush1.msra.mxu0 0.0
  %579 = vmatprep.subr.mxu0 0.0
  %580 = vmatpush1.msra.mxu0 0.0
  %581 = vmatprep.subr.mxu0 0.0
  %582 = vmatpush1.msra.mxu0 %v139
  %583 = vmatprep.subr.mxu0 0.0
  %584 = vmatpush2.msra.mxu0 0.0
  %585 = vmatprep.subr.mxu0 0.0
  %586 = vmatpush2.msra.mxu0 0.0
  %587 = vmatprep.subr.mxu0 0.0
  %588 = vmatpush2.msra.mxu0 0.0
  %589 = vmatprep.subr.mxu0 0.0
  %590 = vmatpush2.msra.mxu0 0.0
  %591 = vmatprep.subr.mxu0 0.0
  %592 = vmatpush2.msra.mxu0 0.0
  %593 = vmatprep.subr.mxu0 0.0
  %594 = vmatpush2.msra.mxu0 0.0
  %595 = vmatprep.subr.mxu0 0.0
  %596 = vmatpush2.msra.mxu0 0.0
  %597 = vmatprep.subr.mxu0 0.0
  %598 = vmatpush2.msra.mxu0 0.0
  %599 = vmatprep.subr.mxu0 0.0
  %600 = vmatpush2.msra.mxu0 0.0
  %601 = vmatprep.subr.mxu0 0.0
  %602 = vmatpush2.msra.mxu0 0.0
  %603 = vmatprep.subr.mxu0 0.0
  %604 = vmatpush2.msra.mxu0 0.0
  %605 = vmatprep.subr.mxu0 0.0
  %606 = vmatpush2.msra.mxu0 0.0
  %607 = vmatprep.subr.mxu0 0.0
  %608 = vmatpush2.msra.mxu0 0.0
  %609 = vmatprep.subr.mxu0 0.0
  %610 = vmatpush2.msra.mxu0 0.0
  %611 = vmatprep.subr.mxu0 0.0
  %612 = vmatpush2.msra.mxu0 0.0
  %613 = vmatprep.subr.mxu0 0.0
  %614 = vmatpush2.msra.mxu0 0.0
  %615 = vmatprep.mubr.f32.mxu0 0.0
  %616 = vmatmul.mubr.f32.gmra.mxu0 %v549
  %v617 = vpop.f32.mrf.mxu0
  %v618 = vadd.f32 %v545, %v617
  %v619 = vpop.f32.mrf.mxu0
  %620 = vdwg.mxu0
  %621 = vrot.lane.b32.xlu0 %v143, 112
  %v622 = vpop.permute.xlu0 %621
  %623 = vrot.lane.b32.xlu0 %v131, 80
  %v624 = vpop.permute.xlu0 %623
  %v625 = vsel %vm147, %v622, 0
  %v627 = vsel %vm147, %v624, 0
  %629 = vmatprep.subr.mxu0 0.0
  %630 = vmatpush1.xpose.msra.mxu0 0.0
  %631 = vmatprep.subr.mxu0 0.0
  %632 = vmatpush1.xpose.msra.mxu0 0.0
  %633 = vmatprep.subr.mxu0 0.0
  %634 = vmatpush1.xpose.msra.mxu0 0.0
  %635 = vmatprep.subr.mxu0 0.0
  %636 = vmatpush1.xpose.msra.mxu0 0.0
  %637 = vmatprep.subr.mxu0 0.0
  %638 = vmatpush1.xpose.msra.mxu0 0.0
  %639 = vmatprep.subr.mxu0 0.0
  %640 = vmatpush1.xpose.msra.mxu0 0.0
  %641 = vmatprep.subr.mxu0 0.0
  %642 = vmatpush1.xpose.msra.mxu0 0.0
  %643 = vmatprep.subr.mxu0 0.0
  %644 = vmatpush1.xpose.msra.mxu0 0.0
  %645 = vmatprep.subr.mxu0 0.0
  %646 = vmatpush1.xpose.msra.mxu0 0.0
  %647 = vmatprep.subr.mxu0 0.0
  %648 = vmatpush1.xpose.msra.mxu0 0.0
  %649 = vmatprep.subr.mxu0 0.0
  %650 = vmatpush1.xpose.msra.mxu0 0.0
  %651 = vmatprep.subr.mxu0 0.0
  %652 = vmatpush1.xpose.msra.mxu0 0.0
  %653 = vmatprep.subr.mxu0 0.0
  %654 = vmatpush1.xpose.msra.mxu0 0.0
  %655 = vmatprep.subr.mxu0 0.0
  %656 = vmatpush1.xpose.msra.mxu0 0.0
  %657 = vmatprep.subr.mxu0 0.0
  %658 = vmatpush1.xpose.msra.mxu0 0.0
  %659 = vmatprep.subr.mxu0 0.0
  %660 = vmatpush1.xpose.msra.mxu0 %v627
  %661 = vmatprep.subr.mxu0 0.0
  %662 = vmatpush2.xpose.msra.mxu0 0.0
  %663 = vmatprep.subr.mxu0 0.0
  %664 = vmatpush2.xpose.msra.mxu0 0.0
  %665 = vmatprep.subr.mxu0 0.0
  %666 = vmatpush2.xpose.msra.mxu0 0.0
  %667 = vmatprep.subr.mxu0 0.0
  %668 = vmatpush2.xpose.msra.mxu0 0.0
  %669 = vmatprep.subr.mxu0 0.0
  %670 = vmatpush2.xpose.msra.mxu0 0.0
  %671 = vmatprep.subr.mxu0 0.0
  %672 = vmatpush2.xpose.msra.mxu0 0.0
  %673 = vmatprep.subr.mxu0 0.0
  %674 = vmatpush2.xpose.msra.mxu0 0.0
  %675 = vmatprep.subr.mxu0 0.0
  %676 = vmatpush2.xpose.msra.mxu0 0.0
  %677 = vmatprep.subr.mxu0 0.0
  %678 = vmatpush2.xpose.msra.mxu0 0.0
  %679 = vmatprep.subr.mxu0 0.0
  %680 = vmatpush2.xpose.msra.mxu0 0.0
  %681 = vmatprep.subr.mxu0 0.0
  %682 = vmatpush2.xpose.msra.mxu0 0.0
  %683 = vmatprep.subr.mxu0 0.0
  %684 = vmatpush2.xpose.msra.mxu0 0.0
  %685 = vmatprep.subr.mxu0 0.0
  %686 = vmatpush2.xpose.msra.mxu0 0.0
  %687 = vmatprep.subr.mxu0 0.0
  %688 = vmatpush2.xpose.msra.mxu0 0.0
  %689 = vmatprep.subr.mxu0 0.0
  %690 = vmatpush2.xpose.msra.mxu0 0.0
  %691 = vmatprep.subr.mxu0 0.0
  %692 = vmatpush2.xpose.msra.mxu0 0.0
  %693 = vmatprep.mubr.f32.mxu0 0.0
  %694 = vmatmul.mubr.f32.gmra.mxu0 %v625
  %v695 = vpop.f32.mrf.mxu0
  %v696 = vadd.f32 0.0, %v695
  %v697 = vpop.f32.mrf.mxu0
  %698 = vdwg.mxu0
  %v699 = vsel %vm147, %v696, -inf
  %700 = vmax.xlane.f32.xlu0 %v699
  %v701 = vpop.xlane.xlu0 %700
  %v702 = vsub.f32 %v696, %v701
  %v703 = vmul.f32 %v702, 1.442695
  %v704 = vpow.pop %v703
  %v705 = vsel %vm147, %v704, 0.0
  %706 = vadd.xlane.f32.xlu0 %v705
  %v707 = vpop.xlane.xlu0 %706
  %v708 = vrcp.pop %v707
  %v709 = vmul.f32 %v704, %v708
  %710 = vrot.lane.b32.xlu0 %v131, 48
  %v711 = vpop.permute.xlu0 %710
  %v714 = vsel %vm147, %v709, 0
  %716 = vmatprep.subr.mxu0 0.0
  %717 = vmatpush1.msra.mxu0 0.0
  %718 = vmatprep.subr.mxu0 0.0
  %719 = vmatpush1.msra.mxu0 0.0
  %720 = vmatprep.subr.mxu0 0.0
  %721 = vmatpush1.msra.mxu0 0.0
  %722 = vmatprep.subr.mxu0 0.0
  %723 = vmatpush1.msra.mxu0 0.0
  %724 = vmatprep.subr.mxu0 0.0
  %725 = vmatpush1.msra.mxu0 0.0
  %726 = vmatprep.subr.mxu0 0.0
  %727 = vmatpush1.msra.mxu0 0.0
  %728 = vmatprep.subr.mxu0 0.0
  %729 = vmatpush1.msra.mxu0 0.0
  %730 = vmatprep.subr.mxu0 0.0
  %731 = vmatpush1.msra.mxu0 0.0
  %732 = vmatprep.subr.mxu0 0.0
  %733 = vmatpush1.msra.mxu0 0.0
  %734 = vmatprep.subr.mxu0 0.0
  %735 = vmatpush1.msra.mxu0 0.0
  %736 = vmatprep.subr.mxu0 0.0
  %737 = vmatpush1.msra.mxu0 0.0
  %738 = vmatprep.subr.mxu0 0.0
  %739 = vmatpush1.msra.mxu0 0.0
  %740 = vmatprep.subr.mxu0 0.0
  %741 = vmatpush1.msra.mxu0 0.0
  %742 = vmatprep.subr.mxu0 0.0
  %743 = vmatpush1.msra.mxu0 0.0
  %744 = vmatprep.subr.mxu0 0.0
  %745 = vmatpush1.msra.mxu0 0.0
  %746 = vmatprep.subr.mxu0 0.0
  %747 = vmatpush1.msra.mxu0 %v711
  %748 = vmatprep.subr.mxu0 0.0
  %749 = vmatpush2.msra.mxu0 0.0
  %750 = vmatprep.subr.mxu0 0.0
  %751 = vmatpush2.msra.mxu0 0.0
  %752 = vmatprep.subr.mxu0 0.0
  %753 = vmatpush2.msra.mxu0 0.0
  %754 = vmatprep.subr.mxu0 0.0
  %755 = vmatpush2.msra.mxu0 0.0
  %756 = vmatprep.subr.mxu0 0.0
  %757 = vmatpush2.msra.mxu0 0.0
  %758 = vmatprep.subr.mxu0 0.0
  %759 = vmatpush2.msra.mxu0 0.0
  %760 = vmatprep.subr.mxu0 0.0
  %761 = vmatpush2.msra.mxu0 0.0
  %762 = vmatprep.subr.mxu0 0.0
  %763 = vmatpush2.msra.mxu0 0.0
  %764 = vmatprep.subr.mxu0 0.0
  %765 = vmatpush2.msra.mxu0 0.0
  %766 = vmatprep.subr.mxu0 0.0
  %767 = vmatpush2.msra.mxu0 0.0
  %768 = vmatprep.subr.mxu0 0.0
  %769 = vmatpush2.msra.mxu0 0.0
  %770 = vmatprep.subr.mxu0 0.0
  %771 = vmatpush2.msra.mxu0 0.0
  %772 = vmatprep.subr.mxu0 0.0
  %773 = vmatpush2.msra.mxu0 0.0
  %774 = vmatprep.subr.mxu0 0.0
  %775 = vmatpush2.msra.mxu0 0.0
  %776 = vmatprep.subr.mxu0 0.0
  %777 = vmatpush2.msra.mxu0 0.0
  %778 = vmatprep.subr.mxu0 0.0
  %779 = vmatpush2.msra.mxu0 0.0
  %780 = vmatprep.mubr.f32.mxu0 0.0
  %781 = vmatmul.mubr.f32.gmra.mxu0 %v714
  %v782 = vpop.f32.mrf.mxu0
  %v783 = vadd.f32 0.0, %v782
  %v784 = vpop.f32.mrf.mxu0
  %785 = vdwg.mxu0
  %v787 = vsel %vm147, %v783, 0
  %789 = vmatprep.subr.mxu0 0.0
  %790 = vmatpush1.msra.mxu0 0.0
  %791 = vmatprep.subr.mxu0 0.0
  %792 = vmatpush1.msra.mxu0 0.0
  %793 = vmatprep.subr.mxu0 0.0
  %794 = vmatpush1.msra.mxu0 0.0
  %795 = vmatprep.subr.mxu0 0.0
  %796 = vmatpush1.msra.mxu0 0.0
  %797 = vmatprep.subr.mxu0 0.0
  %798 = vmatpush1.msra.mxu0 0.0
  %799 = vmatprep.subr.mxu0 0.0
  %800 = vmatpush1.msra.mxu0 0.0
  %801 = vmatprep.subr.mxu0 0.0
  %802 = vmatpush1.msra.mxu0 0.0
  %803 = vmatprep.subr.mxu0 0.0
  %804 = vmatpush1.msra.mxu0 0.0
  %805 = vmatprep.subr.mxu0 0.0
  %806 = vmatpush1.msra.mxu0 0.0
  %807 = vmatprep.subr.mxu0 0.0
  %808 = vmatpush1.msra.mxu0 0.0
  %809 = vmatprep.subr.mxu0 0.0
  %810 = vmatpush1.msra.mxu0 0.0
  %811 = vmatprep.subr.mxu0 0.0
  %812 = vmatpush1.msra.mxu0 0.0
  %813 = vmatprep.subr.mxu0 0.0
  %814 = vmatpush1.msra.mxu0 0.0
  %815 = vmatprep.subr.mxu0 0.0
  %816 = vmatpush1.msra.mxu0 0.0
  %817 = vmatprep.subr.mxu0 0.0
  %818 = vmatpush1.msra.mxu0 0.0
  %819 = vmatprep.subr.mxu0 0.0
  %820 = vmatpush1.msra.mxu0 %v141
  %821 = vmatprep.subr.mxu0 0.0
  %822 = vmatpush2.msra.mxu0 0.0
  %823 = vmatprep.subr.mxu0 0.0
  %824 = vmatpush2.msra.mxu0 0.0
  %825 = vmatprep.subr.mxu0 0.0
  %826 = vmatpush2.msra.mxu0 0.0
  %827 = vmatprep.subr.mxu0 0.0
  %828 = vmatpush2.msra.mxu0 0.0
  %829 = vmatprep.subr.mxu0 0.0
  %830 = vmatpush2.msra.mxu0 0.0
  %831 = vmatprep.subr.mxu0 0.0
  %832 = vmatpush2.msra.mxu0 0.0
  %833 = vmatprep.subr.mxu0 0.0
  %834 = vmatpush2.msra.mxu0 0.0
  %835 = vmatprep.subr.mxu0 0.0
  %836 = vmatpush2.msra.mxu0 0.0
  %837 = vmatprep.subr.mxu0 0.0
  %838 = vmatpush2.msra.mxu0 0.0
  %839 = vmatprep.subr.mxu0 0.0
  %840 = vmatpush2.msra.mxu0 0.0
  %841 = vmatprep.subr.mxu0 0.0
  %842 = vmatpush2.msra.mxu0 0.0
  %843 = vmatprep.subr.mxu0 0.0
  %844 = vmatpush2.msra.mxu0 0.0
  %845 = vmatprep.subr.mxu0 0.0
  %846 = vmatpush2.msra.mxu0 0.0
  %847 = vmatprep.subr.mxu0 0.0
  %848 = vmatpush2.msra.mxu0 0.0
  %849 = vmatprep.subr.mxu0 0.0
  %850 = vmatpush2.msra.mxu0 0.0
  %851 = vmatprep.subr.mxu0 0.0
  %852 = vmatpush2.msra.mxu0 0.0
  %853 = vmatprep.mubr.f32.mxu0 0.0
  %854 = vmatmul.mubr.f32.gmra.mxu0 %v787
  %v855 = vpop.f32.mrf.mxu0
  %v856 = vadd.f32 0.0, %v855
  %v857 = vpop.f32.mrf.mxu0
  %858 = vdwg.mxu0
  %v859 = vadd.f32 %v618, %v856
  %860 = vrot.lane.b32.xlu0 %v143, 104
  %v861 = vpop.permute.xlu0 %860
  %862 = vrot.lane.b32.xlu0 %v131, 72
  %v863 = vpop.permute.xlu0 %862
  %v864 = vsel %vm147, %v861, 0
  %v866 = vsel %vm147, %v863, 0
  %868 = vmatprep.subr.mxu0 0.0
  %869 = vmatpush1.xpose.msra.mxu0 0.0
  %870 = vmatprep.subr.mxu0 0.0
  %871 = vmatpush1.xpose.msra.mxu0 0.0
  %872 = vmatprep.subr.mxu0 0.0
  %873 = vmatpush1.xpose.msra.mxu0 0.0
  %874 = vmatprep.subr.mxu0 0.0
  %875 = vmatpush1.xpose.msra.mxu0 0.0
  %876 = vmatprep.subr.mxu0 0.0
  %877 = vmatpush1.xpose.msra.mxu0 0.0
  %878 = vmatprep.subr.mxu0 0.0
  %879 = vmatpush1.xpose.msra.mxu0 0.0
  %880 = vmatprep.subr.mxu0 0.0
  %881 = vmatpush1.xpose.msra.mxu0 0.0
  %882 = vmatprep.subr.mxu0 0.0
  %883 = vmatpush1.xpose.msra.mxu0 0.0
  %884 = vmatprep.subr.mxu0 0.0
  %885 = vmatpush1.xpose.msra.mxu0 0.0
  %886 = vmatprep.subr.mxu0 0.0
  %887 = vmatpush1.xpose.msra.mxu0 0.0
  %888 = vmatprep.subr.mxu0 0.0
  %889 = vmatpush1.xpose.msra.mxu0 0.0
  %890 = vmatprep.subr.mxu0 0.0
  %891 = vmatpush1.xpose.msra.mxu0 0.0
  %892 = vmatprep.subr.mxu0 0.0
  %893 = vmatpush1.xpose.msra.mxu0 0.0
  %894 = vmatprep.subr.mxu0 0.0
  %895 = vmatpush1.xpose.msra.mxu0 0.0
  %896 = vmatprep.subr.mxu0 0.0
  %897 = vmatpush1.xpose.msra.mxu0 0.0
  %898 = vmatprep.subr.mxu0 0.0
  %899 = vmatpush1.xpose.msra.mxu0 %v866
  %900 = vmatprep.subr.mxu0 0.0
  %901 = vmatpush2.xpose.msra.mxu0 0.0
  %902 = vmatprep.subr.mxu0 0.0
  %903 = vmatpush2.xpose.msra.mxu0 0.0
  %904 = vmatprep.subr.mxu0 0.0
  %905 = vmatpush2.xpose.msra.mxu0 0.0
  %906 = vmatprep.subr.mxu0 0.0
  %907 = vmatpush2.xpose.msra.mxu0 0.0
  %908 = vmatprep.subr.mxu0 0.0
  %909 = vmatpush2.xpose.msra.mxu0 0.0
  %910 = vmatprep.subr.mxu0 0.0
  %911 = vmatpush2.xpose.msra.mxu0 0.0
  %912 = vmatprep.subr.mxu0 0.0
  %913 = vmatpush2.xpose.msra.mxu0 0.0
  %914 = vmatprep.subr.mxu0 0.0
  %915 = vmatpush2.xpose.msra.mxu0 0.0
  %916 = vmatprep.subr.mxu0 0.0
  %917 = vmatpush2.xpose.msra.mxu0 0.0
  %918 = vmatprep.subr.mxu0 0.0
  %919 = vmatpush2.xpose.msra.mxu0 0.0
  %920 = vmatprep.subr.mxu0 0.0
  %921 = vmatpush2.xpose.msra.mxu0 0.0
  %922 = vmatprep.subr.mxu0 0.0
  %923 = vmatpush2.xpose.msra.mxu0 0.0
  %924 = vmatprep.subr.mxu0 0.0
  %925 = vmatpush2.xpose.msra.mxu0 0.0
  %926 = vmatprep.subr.mxu0 0.0
  %927 = vmatpush2.xpose.msra.mxu0 0.0
  %928 = vmatprep.subr.mxu0 0.0
  %929 = vmatpush2.xpose.msra.mxu0 0.0
  %930 = vmatprep.subr.mxu0 0.0
  %931 = vmatpush2.xpose.msra.mxu0 0.0
  %932 = vmatprep.mubr.f32.mxu0 0.0
  %933 = vmatmul.mubr.f32.gmra.mxu0 %v864
  %v934 = vpop.f32.mrf.mxu0
  %v935 = vadd.f32 0.0, %v934
  %v936 = vpop.f32.mrf.mxu0
  %937 = vdwg.mxu0
  %v938 = vsel %vm147, %v935, -inf
  %939 = vmax.xlane.f32.xlu0 %v938
  %v940 = vpop.xlane.xlu0 %939
  %v941 = vsub.f32 %v935, %v940
  %v942 = vmul.f32 %v941, 1.442695
  %v943 = vpow.pop %v942
  %v944 = vsel %vm147, %v943, 0.0
  %945 = vadd.xlane.f32.xlu0 %v944
  %v946 = vpop.xlane.xlu0 %945
  %v947 = vrcp.pop %v946
  %v948 = vmul.f32 %v943, %v947
  %949 = vrot.lane.b32.xlu0 %v131, 40
  %v950 = vpop.permute.xlu0 %949
  %v953 = vsel %vm147, %v948, 0
  %955 = vmatprep.subr.mxu0 0.0
  %956 = vmatpush1.msra.mxu0 0.0
  %957 = vmatprep.subr.mxu0 0.0
  %958 = vmatpush1.msra.mxu0 0.0
  %959 = vmatprep.subr.mxu0 0.0
  %960 = vmatpush1.msra.mxu0 0.0
  %961 = vmatprep.subr.mxu0 0.0
  %962 = vmatpush1.msra.mxu0 0.0
  %963 = vmatprep.subr.mxu0 0.0
  %964 = vmatpush1.msra.mxu0 0.0
  %965 = vmatprep.subr.mxu0 0.0
  %966 = vmatpush1.msra.mxu0 0.0
  %967 = vmatprep.subr.mxu0 0.0
  %968 = vmatpush1.msra.mxu0 0.0
  %969 = vmatprep.subr.mxu0 0.0
  %970 = vmatpush1.msra.mxu0 0.0
  %971 = vmatprep.subr.mxu0 0.0
  %972 = vmatpush1.msra.mxu0 0.0
  %973 = vmatprep.subr.mxu0 0.0
  %974 = vmatpush1.msra.mxu0 0.0
  %975 = vmatprep.subr.mxu0 0.0
  %976 = vmatpush1.msra.mxu0 0.0
  %977 = vmatprep.subr.mxu0 0.0
  %978 = vmatpush1.msra.mxu0 0.0
  %979 = vmatprep.subr.mxu0 0.0
  %980 = vmatpush1.msra.mxu0 0.0
  %981 = vmatprep.subr.mxu0 0.0
  %982 = vmatpush1.msra.mxu0 0.0
  %983 = vmatprep.subr.mxu0 0.0
  %984 = vmatpush1.msra.mxu0 0.0
  %985 = vmatprep.subr.mxu0 0.0
  %986 = vmatpush1.msra.mxu0 %v950
  %987 = vmatprep.subr.mxu0 0.0
  %988 = vmatpush2.msra.mxu0 0.0
  %989 = vmatprep.subr.mxu0 0.0
  %990 = vmatpush2.msra.mxu0 0.0
  %991 = vmatprep.subr.mxu0 0.0
  %992 = vmatpush2.msra.mxu0 0.0
  %993 = vmatprep.subr.mxu0 0.0
  %994 = vmatpush2.msra.mxu0 0.0
  %995 = vmatprep.subr.mxu0 0.0
  %996 = vmatpush2.msra.mxu0 0.0
  %997 = vmatprep.subr.mxu0 0.0
  %998 = vmatpush2.msra.mxu0 0.0
  %999 = vmatprep.subr.mxu0 0.0
  %1000 = vmatpush2.msra.mxu0 0.0
  %1001 = vmatprep.subr.mxu0 0.0
  %1002 = vmatpush2.msra.mxu0 0.0
  %1003 = vmatprep.subr.mxu0 0.0
  %1004 = vmatpush2.msra.mxu0 0.0
  %1005 = vmatprep.subr.mxu0 0.0
  %1006 = vmatpush2.msra.mxu0 0.0
  %1007 = vmatprep.subr.mxu0 0.0
  %1008 = vmatpush2.msra.mxu0 0.0
  %1009 = vmatprep.subr.mxu0 0.0
  %1010 = vmatpush2.msra.mxu0 0.0
  %1011 = vmatprep.subr.mxu0 0.0
  %1012 = vmatpush2.msra.mxu0 0.0
  %1013 = vmatprep.subr.mxu0 0.0
  %1014 = vmatpush2.msra.mxu0 0.0
  %1015 = vmatprep.subr.mxu0 0.0
  %1016 = vmatpush2.msra.mxu0 0.0
  %1017 = vmatprep.subr.mxu0 0.0
  %1018 = vmatpush2.msra.mxu0 0.0
  %1019 = vmatprep.mubr.f32.mxu0 0.0
  %1020 = vmatmul.mubr.f32.gmra.mxu0 %v953
  %v1021 = vpop.f32.mrf.mxu0
  %v1022 = vadd.f32 0.0, %v1021
  %v1023 = vpop.f32.mrf.mxu0
  %1024 = vdwg.mxu0
  %v1026 = vsel %vm147, %v1022, 0
  %1028 = vmatprep.subr.mxu0 0.0
  %1029 = vmatpush1.msra.mxu0 0.0
  %1030 = vmatprep.subr.mxu0 0.0
  %1031 = vmatpush1.msra.mxu0 0.0
  %1032 = vmatprep.subr.mxu0 0.0
  %1033 = vmatpush1.msra.mxu0 0.0
  %1034 = vmatprep.subr.mxu0 0.0
  %1035 = vmatpush1.msra.mxu0 0.0
  %1036 = vmatprep.subr.mxu0 0.0
  %1037 = vmatpush1.msra.mxu0 0.0
  %1038 = vmatprep.subr.mxu0 0.0
  %1039 = vmatpush1.msra.mxu0 0.0
  %1040 = vmatprep.subr.mxu0 0.0
  %1041 = vmatpush1.msra.mxu0 0.0
  %1042 = vmatprep.subr.mxu0 0.0
  %1043 = vmatpush1.msra.mxu0 0.0
  %1044 = vmatprep.subr.mxu0 0.0
  %1045 = vmatpush1.msra.mxu0 0.0
  %1046 = vmatprep.subr.mxu0 0.0
  %1047 = vmatpush1.msra.mxu0 0.0
  %1048 = vmatprep.subr.mxu0 0.0
  %1049 = vmatpush1.msra.mxu0 0.0
  %1050 = vmatprep.subr.mxu0 0.0
  %1051 = vmatpush1.msra.mxu0 0.0
  %1052 = vmatprep.subr.mxu0 0.0
  %1053 = vmatpush1.msra.mxu0 0.0
  %1054 = vmatprep.subr.mxu0 0.0
  %1055 = vmatpush1.msra.mxu0 0.0
  %1056 = vmatprep.subr.mxu0 0.0
  %1057 = vmatpush1.msra.mxu0 0.0
  %1058 = vmatprep.subr.mxu0 0.0
  %1059 = vmatpush1.msra.mxu0 %v142
  %1060 = vmatprep.subr.mxu0 0.0
  %1061 = vmatpush2.msra.mxu0 0.0
  %1062 = vmatprep.subr.mxu0 0.0
  %1063 = vmatpush2.msra.mxu0 0.0
  %1064 = vmatprep.subr.mxu0 0.0
  %1065 = vmatpush2.msra.mxu0 0.0
  %1066 = vmatprep.subr.mxu0 0.0
  %1067 = vmatpush2.msra.mxu0 0.0
  %1068 = vmatprep.subr.mxu0 0.0
  %1069 = vmatpush2.msra.mxu0 0.0
  %1070 = vmatprep.subr.mxu0 0.0
  %1071 = vmatpush2.msra.mxu0 0.0
  %1072 = vmatprep.subr.mxu0 0.0
  %1073 = vmatpush2.msra.mxu0 0.0
  %1074 = vmatprep.subr.mxu0 0.0
  %1075 = vmatpush2.msra.mxu0 0.0
  %1076 = vmatprep.subr.mxu0 0.0
  %1077 = vmatpush2.msra.mxu0 0.0
  %1078 = vmatprep.subr.mxu0 0.0
  %1079 = vmatpush2.msra.mxu0 0.0
  %1080 = vmatprep.subr.mxu0 0.0
  %1081 = vmatpush2.msra.mxu0 0.0
  %1082 = vmatprep.subr.mxu0 0.0
  %1083 = vmatpush2.msra.mxu0 0.0
  %1084 = vmatprep.subr.mxu0 0.0
  %1085 = vmatpush2.msra.mxu0 0.0
  %1086 = vmatprep.subr.mxu0 0.0
  %1087 = vmatpush2.msra.mxu0 0.0
  %1088 = vmatprep.subr.mxu0 0.0
  %1089 = vmatpush2.msra.mxu0 0.0
  %1090 = vmatprep.subr.mxu0 0.0
  %1091 = vmatpush2.msra.mxu0 0.0
  %1092 = vmatprep.mubr.f32.mxu0 0.0
  %1093 = vmatmul.mubr.f32.gmra.mxu0 %v1026
  %v1094 = vpop.f32.mrf.mxu0
  %v1095 = vadd.f32 0.0, %v1094
  %v1096 = vpop.f32.mrf.mxu0
  %1097 = vdwg.mxu0
  %v1098 = vadd.f32 %v859, %v1095
  %v1099 = vmul.f32 %v136, 0.35355338
  %1101 = vrot.lane.b32.xlu0 %v136, 96
  %v1102 = vpop.permute.xlu0 %1101
  %v1104 = vsel %vm147, %v1099, 0
  %v1106 = vsel %vm147, %v1102, 0
  %1108 = vmatprep.subr.mxu0 0.0
  %1109 = vmatpush1.xpose.msra.mxu0 0.0
  %1110 = vmatprep.subr.mxu0 0.0
  %1111 = vmatpush1.xpose.msra.mxu0 0.0
  %1112 = vmatprep.subr.mxu0 0.0
  %1113 = vmatpush1.xpose.msra.mxu0 0.0
  %1114 = vmatprep.subr.mxu0 0.0
  %1115 = vmatpush1.xpose.msra.mxu0 0.0
  %1116 = vmatprep.subr.mxu0 0.0
  %1117 = vmatpush1.xpose.msra.mxu0 0.0
  %1118 = vmatprep.subr.mxu0 0.0
  %1119 = vmatpush1.xpose.msra.mxu0 0.0
  %1120 = vmatprep.subr.mxu0 0.0
  %1121 = vmatpush1.xpose.msra.mxu0 0.0
  %1122 = vmatprep.subr.mxu0 0.0
  %1123 = vmatpush1.xpose.msra.mxu0 0.0
  %1124 = vmatprep.subr.mxu0 0.0
  %1125 = vmatpush1.xpose.msra.mxu0 0.0
  %1126 = vmatprep.subr.mxu0 0.0
  %1127 = vmatpush1.xpose.msra.mxu0 0.0
  %1128 = vmatprep.subr.mxu0 0.0
  %1129 = vmatpush1.xpose.msra.mxu0 0.0
  %1130 = vmatprep.subr.mxu0 0.0
  %1131 = vmatpush1.xpose.msra.mxu0 0.0
  %1132 = vmatprep.subr.mxu0 0.0
  %1133 = vmatpush1.xpose.msra.mxu0 0.0
  %1134 = vmatprep.subr.mxu0 0.0
  %1135 = vmatpush1.xpose.msra.mxu0 0.0
  %1136 = vmatprep.subr.mxu0 0.0
  %1137 = vmatpush1.xpose.msra.mxu0 0.0
  %1138 = vmatprep.subr.mxu0 0.0
  %1139 = vmatpush1.xpose.msra.mxu0 %v1106
  %1140 = vmatprep.subr.mxu0 0.0
  %1141 = vmatpush2.xpose.msra.mxu0 0.0
  %1142 = vmatprep.subr.mxu0 0.0
  %1143 = vmatpush2.xpose.msra.mxu0 0.0
  %1144 = vmatprep.subr.mxu0 0.0
  %1145 = vmatpush2.xpose.msra.mxu0 0.0
  %1146 = vmatprep.subr.mxu0 0.0
  %1147 = vmatpush2.xpose.msra.mxu0 0.0
  %1148 = vmatprep.subr.mxu0 0.0
  %1149 = vmatpush2.xpose.msra.mxu0 0.0
  %1150 = vmatprep.subr.mxu0 0.0
  %1151 = vmatpush2.xpose.msra.mxu0 0.0
  %1152 = vmatprep.subr.mxu0 0.0
  %1153 = vmatpush2.xpose.msra.mxu0 0.0
  %1154 = vmatprep.subr.mxu0 0.0
  %1155 = vmatpush2.xpose.msra.mxu0 0.0
  %1156 = vmatprep.subr.mxu0 0.0
  %1157 = vmatpush2.xpose.msra.mxu0 0.0
  %1158 = vmatprep.subr.mxu0 0.0
  %1159 = vmatpush2.xpose.msra.mxu0 0.0
  %1160 = vmatprep.subr.mxu0 0.0
  %1161 = vmatpush2.xpose.msra.mxu0 0.0
  %1162 = vmatprep.subr.mxu0 0.0
  %1163 = vmatpush2.xpose.msra.mxu0 0.0
  %1164 = vmatprep.subr.mxu0 0.0
  %1165 = vmatpush2.xpose.msra.mxu0 0.0
  %1166 = vmatprep.subr.mxu0 0.0
  %1167 = vmatpush2.xpose.msra.mxu0 0.0
  %1168 = vmatprep.subr.mxu0 0.0
  %1169 = vmatpush2.xpose.msra.mxu0 0.0
  %1170 = vmatprep.subr.mxu0 0.0
  %1171 = vmatpush2.xpose.msra.mxu0 0.0
  %1172 = vmatprep.mubr.f32.mxu0 0.0
  %1173 = vmatmul.mubr.f32.gmra.mxu0 %v1104
  %v1174 = vpop.f32.mrf.mxu0
  %v1175 = vadd.f32 0.0, %v1174
  %v1176 = vpop.f32.mrf.mxu0
  %1177 = vdwg.mxu0
  %v1178 = vsel %vm147, %v1175, -inf
  %1179 = vmax.xlane.f32.xlu0 %v1178
  %v1180 = vpop.xlane.xlu0 %1179
  %v1181 = vsub.f32 %v1175, %v1180
  %v1182 = vmul.f32 %v1181, 1.442695
  %v1183 = vpow.pop %v1182
  %v1184 = vsel %vm147, %v1183, 0.0
  %1185 = vadd.xlane.f32.xlu0 %v1184
  %v1186 = vpop.xlane.xlu0 %1185
  %v1187 = vrcp.pop %v1186
  %v1188 = vmul.f32 %v1183, %v1187
  %1189 = vrot.lane.b32.xlu0 %v136, 64
  %v1190 = vpop.permute.xlu0 %1189
  %v1193 = vsel %vm147, %v1188, 0
  %1195 = vmatprep.subr.mxu0 0.0
  %1196 = vmatpush1.msra.mxu0 0.0
  %1197 = vmatprep.subr.mxu0 0.0
  %1198 = vmatpush1.msra.mxu0 0.0
  %1199 = vmatprep.subr.mxu0 0.0
  %1200 = vmatpush1.msra.mxu0 0.0
  %1201 = vmatprep.subr.mxu0 0.0
  %1202 = vmatpush1.msra.mxu0 0.0
  %1203 = vmatprep.subr.mxu0 0.0
  %1204 = vmatpush1.msra.mxu0 0.0
  %1205 = vmatprep.subr.mxu0 0.0
  %1206 = vmatpush1.msra.mxu0 0.0
  %1207 = vmatprep.subr.mxu0 0.0
  %1208 = vmatpush1.msra.mxu0 0.0
  %1209 = vmatprep.subr.mxu0 0.0
  %1210 = vmatpush1.msra.mxu0 0.0
  %1211 = vmatprep.subr.mxu0 0.0
  %1212 = vmatpush1.msra.mxu0 0.0
  %1213 = vmatprep.subr.mxu0 0.0
  %1214 = vmatpush1.msra.mxu0 0.0
  %1215 = vmatprep.subr.mxu0 0.0
  %1216 = vmatpush1.msra.mxu0 0.0
  %1217 = vmatprep.subr.mxu0 0.0
  %1218 = vmatpush1.msra.mxu0 0.0
  %1219 = vmatprep.subr.mxu0 0.0
  %1220 = vmatpush1.msra.mxu0 0.0
  %1221 = vmatprep.subr.mxu0 0.0
  %1222 = vmatpush1.msra.mxu0 0.0
  %1223 = vmatprep.subr.mxu0 0.0
  %1224 = vmatpush1.msra.mxu0 0.0
  %1225 = vmatprep.subr.mxu0 0.0
  %1226 = vmatpush1.msra.mxu0 %v1190
  %1227 = vmatprep.subr.mxu0 0.0
  %1228 = vmatpush2.msra.mxu0 0.0
  %1229 = vmatprep.subr.mxu0 0.0
  %1230 = vmatpush2.msra.mxu0 0.0
  %1231 = vmatprep.subr.mxu0 0.0
  %1232 = vmatpush2.msra.mxu0 0.0
  %1233 = vmatprep.subr.mxu0 0.0
  %1234 = vmatpush2.msra.mxu0 0.0
  %1235 = vmatprep.subr.mxu0 0.0
  %1236 = vmatpush2.msra.mxu0 0.0
  %1237 = vmatprep.subr.mxu0 0.0
  %1238 = vmatpush2.msra.mxu0 0.0
  %1239 = vmatprep.subr.mxu0 0.0
  %1240 = vmatpush2.msra.mxu0 0.0
  %1241 = vmatprep.subr.mxu0 0.0
  %1242 = vmatpush2.msra.mxu0 0.0
  %1243 = vmatprep.subr.mxu0 0.0
  %1244 = vmatpush2.msra.mxu0 0.0
  %1245 = vmatprep.subr.mxu0 0.0
  %1246 = vmatpush2.msra.mxu0 0.0
  %1247 = vmatprep.subr.mxu0 0.0
  %1248 = vmatpush2.msra.mxu0 0.0
  %1249 = vmatprep.subr.mxu0 0.0
  %1250 = vmatpush2.msra.mxu0 0.0
  %1251 = vmatprep.subr.mxu0 0.0
  %1252 = vmatpush2.msra.mxu0 0.0
  %1253 = vmatprep.subr.mxu0 0.0
  %1254 = vmatpush2.msra.mxu0 0.0
  %1255 = vmatprep.subr.mxu0 0.0
  %1256 = vmatpush2.msra.mxu0 0.0
  %1257 = vmatprep.subr.mxu0 0.0
  %1258 = vmatpush2.msra.mxu0 0.0
  %1259 = vmatprep.mubr.f32.mxu0 0.0
  %1260 = vmatmul.mubr.f32.gmra.mxu0 %v1193
  %v1261 = vpop.f32.mrf.mxu0
  %v1262 = vadd.f32 0.0, %v1261
  %v1263 = vpop.f32.mrf.mxu0
  %1264 = vdwg.mxu0
  %1265 = vrot.lane.b32.xlu0 %v1099, 120
  %v1266 = vpop.permute.xlu0 %1265
  %1267 = vrot.lane.b32.xlu0 %v136, 88
  %v1268 = vpop.permute.xlu0 %1267
  %v1269 = vsel %vm147, %v1266, 0
  %v1271 = vsel %vm147, %v1268, 0
  %1273 = vmatprep.subr.mxu0 0.0
  %1274 = vmatpush1.xpose.msra.mxu0 0.0
  %1275 = vmatprep.subr.mxu0 0.0
  %1276 = vmatpush1.xpose.msra.mxu0 0.0
  %1277 = vmatprep.subr.mxu0 0.0
  %1278 = vmatpush1.xpose.msra.mxu0 0.0
  %1279 = vmatprep.subr.mxu0 0.0
  %1280 = vmatpush1.xpose.msra.mxu0 0.0
  %1281 = vmatprep.subr.mxu0 0.0
  %1282 = vmatpush1.xpose.msra.mxu0 0.0
  %1283 = vmatprep.subr.mxu0 0.0
  %1284 = vmatpush1.xpose.msra.mxu0 0.0
  %1285 = vmatprep.subr.mxu0 0.0
  %1286 = vmatpush1.xpose.msra.mxu0 0.0
  %1287 = vmatprep.subr.mxu0 0.0
  %1288 = vmatpush1.xpose.msra.mxu0 0.0
  %1289 = vmatprep.subr.mxu0 0.0
  %1290 = vmatpush1.xpose.msra.mxu0 0.0
  %1291 = vmatprep.subr.mxu0 0.0
  %1292 = vmatpush1.xpose.msra.mxu0 0.0
  %1293 = vmatprep.subr.mxu0 0.0
  %1294 = vmatpush1.xpose.msra.mxu0 0.0
  %1295 = vmatprep.subr.mxu0 0.0
  %1296 = vmatpush1.xpose.msra.mxu0 0.0
  %1297 = vmatprep.subr.mxu0 0.0
  %1298 = vmatpush1.xpose.msra.mxu0 0.0
  %1299 = vmatprep.subr.mxu0 0.0
  %1300 = vmatpush1.xpose.msra.mxu0 0.0
  %1301 = vmatprep.subr.mxu0 0.0
  %1302 = vmatpush1.xpose.msra.mxu0 0.0
  %1303 = vmatprep.subr.mxu0 0.0
  %1304 = vmatpush1.xpose.msra.mxu0 %v1271
  %1305 = vmatprep.subr.mxu0 0.0
  %1306 = vmatpush2.xpose.msra.mxu0 0.0
  %1307 = vmatprep.subr.mxu0 0.0
  %1308 = vmatpush2.xpose.msra.mxu0 0.0
  %1309 = vmatprep.subr.mxu0 0.0
  %1310 = vmatpush2.xpose.msra.mxu0 0.0
  %1311 = vmatprep.subr.mxu0 0.0
  %1312 = vmatpush2.xpose.msra.mxu0 0.0
  %1313 = vmatprep.subr.mxu0 0.0
  %1314 = vmatpush2.xpose.msra.mxu0 0.0
  %1315 = vmatprep.subr.mxu0 0.0
  %1316 = vmatpush2.xpose.msra.mxu0 0.0
  %1317 = vmatprep.subr.mxu0 0.0
  %1318 = vmatpush2.xpose.msra.mxu0 0.0
  %1319 = vmatprep.subr.mxu0 0.0
  %1320 = vmatpush2.xpose.msra.mxu0 0.0
  %1321 = vmatprep.subr.mxu0 0.0
  %1322 = vmatpush2.xpose.msra.mxu0 0.0
  %1323 = vmatprep.subr.mxu0 0.0
  %1324 = vmatpush2.xpose.msra.mxu0 0.0
  %1325 = vmatprep.subr.mxu0 0.0
  %1326 = vmatpush2.xpose.msra.mxu0 0.0
  %1327 = vmatprep.subr.mxu0 0.0
  %1328 = vmatpush2.xpose.msra.mxu0 0.0
  %1329 = vmatprep.subr.mxu0 0.0
  %1330 = vmatpush2.xpose.msra.mxu0 0.0
  %1331 = vmatprep.subr.mxu0 0.0
  %1332 = vmatpush2.xpose.msra.mxu0 0.0
  %1333 = vmatprep.subr.mxu0 0.0
  %1334 = vmatpush2.xpose.msra.mxu0 0.0
  %1335 = vmatprep.subr.mxu0 0.0
  %1336 = vmatpush2.xpose.msra.mxu0 0.0
  %1337 = vmatprep.mubr.f32.mxu0 0.0
  %1338 = vmatmul.mubr.f32.gmra.mxu0 %v1269
  %v1339 = vpop.f32.mrf.mxu0
  %v1340 = vadd.f32 0.0, %v1339
  %v1341 = vpop.f32.mrf.mxu0
  %1342 = vdwg.mxu0
  %v1343 = vsel %vm147, %v1340, -inf
  %1344 = vmax.xlane.f32.xlu0 %v1343
  %v1345 = vpop.xlane.xlu0 %1344
  %v1346 = vsub.f32 %v1340, %v1345
  %v1347 = vmul.f32 %v1346, 1.442695
  %v1348 = vpow.pop %v1347
  %v1349 = vsel %vm147, %v1348, 0.0
  %1350 = vadd.xlane.f32.xlu0 %v1349
  %v1351 = vpop.xlane.xlu0 %1350
  %v1352 = vrcp.pop %v1351
  %v1353 = vmul.f32 %v1348, %v1352
  %1354 = vrot.lane.b32.xlu0 %v136, 56
  %v1355 = vpop.permute.xlu0 %1354
  %v1358 = vsel %vm147, %v1353, 0
  %1360 = vmatprep.subr.mxu0 0.0
  %1361 = vmatpush1.msra.mxu0 0.0
  %1362 = vmatprep.subr.mxu0 0.0
  %1363 = vmatpush1.msra.mxu0 0.0
  %1364 = vmatprep.subr.mxu0 0.0
  %1365 = vmatpush1.msra.mxu0 0.0
  %1366 = vmatprep.subr.mxu0 0.0
  %1367 = vmatpush1.msra.mxu0 0.0
  %1368 = vmatprep.subr.mxu0 0.0
  %1369 = vmatpush1.msra.mxu0 0.0
  %1370 = vmatprep.subr.mxu0 0.0
  %1371 = vmatpush1.msra.mxu0 0.0
  %1372 = vmatprep.subr.mxu0 0.0
  %1373 = vmatpush1.msra.mxu0 0.0
  %1374 = vmatprep.subr.mxu0 0.0
  %1375 = vmatpush1.msra.mxu0 0.0
  %1376 = vmatprep.subr.mxu0 0.0
  %1377 = vmatpush1.msra.mxu0 0.0
  %1378 = vmatprep.subr.mxu0 0.0
  %1379 = vmatpush1.msra.mxu0 0.0
  %1380 = vmatprep.subr.mxu0 0.0
  %1381 = vmatpush1.msra.mxu0 0.0
  %1382 = vmatprep.subr.mxu0 0.0
  %1383 = vmatpush1.msra.mxu0 0.0
  %1384 = vmatprep.subr.mxu0 0.0
  %1385 = vmatpush1.msra.mxu0 0.0
  %1386 = vmatprep.subr.mxu0 0.0
  %1387 = vmatpush1.msra.mxu0 0.0
  %1388 = vmatprep.subr.mxu0 0.0
  %1389 = vmatpush1.msra.mxu0 0.0
  %1390 = vmatprep.subr.mxu0 0.0
  %1391 = vmatpush1.msra.mxu0 %v1355
  %1392 = vmatprep.subr.mxu0 0.0
  %1393 = vmatpush2.msra.mxu0 0.0
  %1394 = vmatprep.subr.mxu0 0.0
  %1395 = vmatpush2.msra.mxu0 0.0
  %1396 = vmatprep.subr.mxu0 0.0
  %1397 = vmatpush2.msra.mxu0 0.0
  %1398 = vmatprep.subr.mxu0 0.0
  %1399 = vmatpush2.msra.mxu0 0.0
  %1400 = vmatprep.subr.mxu0 0.0
  %1401 = vmatpush2.msra.mxu0 0.0
  %1402 = vmatprep.subr.mxu0 0.0
  %1403 = vmatpush2.msra.mxu0 0.0
  %1404 = vmatprep.subr.mxu0 0.0
  %1405 = vmatpush2.msra.mxu0 0.0
  %1406 = vmatprep.subr.mxu0 0.0
  %1407 = vmatpush2.msra.mxu0 0.0
  %1408 = vmatprep.subr.mxu0 0.0
  %1409 = vmatpush2.msra.mxu0 0.0
  %1410 = vmatprep.subr.mxu0 0.0
  %1411 = vmatpush2.msra.mxu0 0.0
  %1412 = vmatprep.subr.mxu0 0.0
  %1413 = vmatpush2.msra.mxu0 0.0
  %1414 = vmatprep.subr.mxu0 0.0
  %1415 = vmatpush2.msra.mxu0 0.0
  %1416 = vmatprep.subr.mxu0 0.0
  %1417 = vmatpush2.msra.mxu0 0.0
  %1418 = vmatprep.subr.mxu0 0.0
  %1419 = vmatpush2.msra.mxu0 0.0
  %1420 = vmatprep.subr.mxu0 0.0
  %1421 = vmatpush2.msra.mxu0 0.0
  %1422 = vmatprep.subr.mxu0 0.0
  %1423 = vmatpush2.msra.mxu0 0.0
  %1424 = vmatprep.mubr.f32.mxu0 0.0
  %1425 = vmatmul.mubr.f32.gmra.mxu0 %v1358
  %v1426 = vpop.f32.mrf.mxu0
  %v1427 = vadd.f32 0.0, %v1426
  %v1428 = vpop.f32.mrf.mxu0
  %1429 = vdwg.mxu0
  %v1431 = vsel %vm147, %v1427, 0
  %1433 = vmatprep.subr.mxu0 0.0
  %1434 = vmatpush1.msra.mxu0 0.0
  %1435 = vmatprep.subr.mxu0 0.0
  %1436 = vmatpush1.msra.mxu0 0.0
  %1437 = vmatprep.subr.mxu0 0.0
  %1438 = vmatpush1.msra.mxu0 0.0
  %1439 = vmatprep.subr.mxu0 0.0
  %1440 = vmatpush1.msra.mxu0 0.0
  %1441 = vmatprep.subr.mxu0 0.0
  %1442 = vmatpush1.msra.mxu0 0.0
  %1443 = vmatprep.subr.mxu0 0.0
  %1444 = vmatpush1.msra.mxu0 0.0
  %1445 = vmatprep.subr.mxu0 0.0
  %1446 = vmatpush1.msra.mxu0 0.0
  %1447 = vmatprep.subr.mxu0 0.0
  %1448 = vmatpush1.msra.mxu0 0.0
  %1449 = vmatprep.subr.mxu0 0.0
  %1450 = vmatpush1.msra.mxu0 0.0
  %1451 = vmatprep.subr.mxu0 0.0
  %1452 = vmatpush1.msra.mxu0 0.0
  %1453 = vmatprep.subr.mxu0 0.0
  %1454 = vmatpush1.msra.mxu0 0.0
  %1455 = vmatprep.subr.mxu0 0.0
  %1456 = vmatpush1.msra.mxu0 0.0
  %1457 = vmatprep.subr.mxu0 0.0
  %1458 = vmatpush1.msra.mxu0 0.0
  %1459 = vmatprep.subr.mxu0 0.0
  %1460 = vmatpush1.msra.mxu0 0.0
  %1461 = vmatprep.subr.mxu0 0.0
  %1462 = vmatpush1.msra.mxu0 0.0
  %1463 = vmatprep.subr.mxu0 0.0
  %1464 = vmatpush1.msra.mxu0 %v140
  %1465 = vmatprep.subr.mxu0 0.0
  %1466 = vmatpush2.msra.mxu0 0.0
  %1467 = vmatprep.subr.mxu0 0.0
  %1468 = vmatpush2.msra.mxu0 0.0
  %1469 = vmatprep.subr.mxu0 0.0
  %1470 = vmatpush2.msra.mxu0 0.0
  %1471 = vmatprep.subr.mxu0 0.0
  %1472 = vmatpush2.msra.mxu0 0.0
  %1473 = vmatprep.subr.mxu0 0.0
  %1474 = vmatpush2.msra.mxu0 0.0
  %1475 = vmatprep.subr.mxu0 0.0
  %1476 = vmatpush2.msra.mxu0 0.0
  %1477 = vmatprep.subr.mxu0 0.0
  %1478 = vmatpush2.msra.mxu0 0.0
  %1479 = vmatprep.subr.mxu0 0.0
  %1480 = vmatpush2.msra.mxu0 0.0
  %1481 = vmatprep.subr.mxu0 0.0
  %1482 = vmatpush2.msra.mxu0 0.0
  %1483 = vmatprep.subr.mxu0 0.0
  %1484 = vmatpush2.msra.mxu0 0.0
  %1485 = vmatprep.subr.mxu0 0.0
  %1486 = vmatpush2.msra.mxu0 0.0
  %1487 = vmatprep.subr.mxu0 0.0
  %1488 = vmatpush2.msra.mxu0 0.0
  %1489 = vmatprep.subr.mxu0 0.0
  %1490 = vmatpush2.msra.mxu0 0.0
  %1491 = vmatprep.subr.mxu0 0.0
  %1492 = vmatpush2.msra.mxu0 0.0
  %1493 = vmatprep.subr.mxu0 0.0
  %1494 = vmatpush2.msra.mxu0 0.0
  %1495 = vmatprep.subr.mxu0 0.0
  %1496 = vmatpush2.msra.mxu0 0.0
  %1497 = vmatprep.mubr.f32.mxu0 0.0
  %1498 = vmatmul.mubr.f32.gmra.mxu0 %v1431
  %v1499 = vpop.f32.mrf.mxu0
  %v1500 = vadd.f32 0.0, %v1499
  %v1501 = vpop.f32.mrf.mxu0
  %1502 = vdwg.mxu0
  %v1504 = vsel %vm147, %v1262, 0
  %1506 = vmatprep.subr.mxu0 0.0
  %1507 = vmatpush1.msra.mxu0 0.0
  %1508 = vmatprep.subr.mxu0 0.0
  %1509 = vmatpush1.msra.mxu0 0.0
  %1510 = vmatprep.subr.mxu0 0.0
  %1511 = vmatpush1.msra.mxu0 0.0
  %1512 = vmatprep.subr.mxu0 0.0
  %1513 = vmatpush1.msra.mxu0 0.0
  %1514 = vmatprep.subr.mxu0 0.0
  %1515 = vmatpush1.msra.mxu0 0.0
  %1516 = vmatprep.subr.mxu0 0.0
  %1517 = vmatpush1.msra.mxu0 0.0
  %1518 = vmatprep.subr.mxu0 0.0
  %1519 = vmatpush1.msra.mxu0 0.0
  %1520 = vmatprep.subr.mxu0 0.0
  %1521 = vmatpush1.msra.mxu0 0.0
  %1522 = vmatprep.subr.mxu0 0.0
  %1523 = vmatpush1.msra.mxu0 0.0
  %1524 = vmatprep.subr.mxu0 0.0
  %1525 = vmatpush1.msra.mxu0 0.0
  %1526 = vmatprep.subr.mxu0 0.0
  %1527 = vmatpush1.msra.mxu0 0.0
  %1528 = vmatprep.subr.mxu0 0.0
  %1529 = vmatpush1.msra.mxu0 0.0
  %1530 = vmatprep.subr.mxu0 0.0
  %1531 = vmatpush1.msra.mxu0 0.0
  %1532 = vmatprep.subr.mxu0 0.0
  %1533 = vmatpush1.msra.mxu0 0.0
  %1534 = vmatprep.subr.mxu0 0.0
  %1535 = vmatpush1.msra.mxu0 0.0
  %1536 = vmatprep.subr.mxu0 0.0
  %1537 = vmatpush1.msra.mxu0 %v139
  %1538 = vmatprep.subr.mxu0 0.0
  %1539 = vmatpush2.msra.mxu0 0.0
  %1540 = vmatprep.subr.mxu0 0.0
  %1541 = vmatpush2.msra.mxu0 0.0
  %1542 = vmatprep.subr.mxu0 0.0
  %1543 = vmatpush2.msra.mxu0 0.0
  %1544 = vmatprep.subr.mxu0 0.0
  %1545 = vmatpush2.msra.mxu0 0.0
  %1546 = vmatprep.subr.mxu0 0.0
  %1547 = vmatpush2.msra.mxu0 0.0
  %1548 = vmatprep.subr.mxu0 0.0
  %1549 = vmatpush2.msra.mxu0 0.0
  %1550 = vmatprep.subr.mxu0 0.0
  %1551 = vmatpush2.msra.mxu0 0.0
  %1552 = vmatprep.subr.mxu0 0.0
  %1553 = vmatpush2.msra.mxu0 0.0
  %1554 = vmatprep.subr.mxu0 0.0
  %1555 = vmatpush2.msra.mxu0 0.0
  %1556 = vmatprep.subr.mxu0 0.0
  %1557 = vmatpush2.msra.mxu0 0.0
  %1558 = vmatprep.subr.mxu0 0.0
  %1559 = vmatpush2.msra.mxu0 0.0
  %1560 = vmatprep.subr.mxu0 0.0
  %1561 = vmatpush2.msra.mxu0 0.0
  %1562 = vmatprep.subr.mxu0 0.0
  %1563 = vmatpush2.msra.mxu0 0.0
  %1564 = vmatprep.subr.mxu0 0.0
  %1565 = vmatpush2.msra.mxu0 0.0
  %1566 = vmatprep.subr.mxu0 0.0
  %1567 = vmatpush2.msra.mxu0 0.0
  %1568 = vmatprep.subr.mxu0 0.0
  %1569 = vmatpush2.msra.mxu0 0.0
  %1570 = vmatprep.mubr.f32.mxu0 0.0
  %1571 = vmatmul.mubr.f32.gmra.mxu0 %v1504
  %v1572 = vpop.f32.mrf.mxu0
  %v1573 = vadd.f32 %v1500, %v1572
  %v1574 = vpop.f32.mrf.mxu0
  %1575 = vdwg.mxu0
  %1576 = vrot.lane.b32.xlu0 %v1099, 112
  %v1577 = vpop.permute.xlu0 %1576
  %1578 = vrot.lane.b32.xlu0 %v136, 80
  %v1579 = vpop.permute.xlu0 %1578
  %v1580 = vsel %vm147, %v1577, 0
  %v1582 = vsel %vm147, %v1579, 0
  %1584 = vmatprep.subr.mxu0 0.0
  %1585 = vmatpush1.xpose.msra.mxu0 0.0
  %1586 = vmatprep.subr.mxu0 0.0
  %1587 = vmatpush1.xpose.msra.mxu0 0.0
  %1588 = vmatprep.subr.mxu0 0.0
  %1589 = vmatpush1.xpose.msra.mxu0 0.0
  %1590 = vmatprep.subr.mxu0 0.0
  %1591 = vmatpush1.xpose.msra.mxu0 0.0
  %1592 = vmatprep.subr.mxu0 0.0
  %1593 = vmatpush1.xpose.msra.mxu0 0.0
  %1594 = vmatprep.subr.mxu0 0.0
  %1595 = vmatpush1.xpose.msra.mxu0 0.0
  %1596 = vmatprep.subr.mxu0 0.0
  %1597 = vmatpush1.xpose.msra.mxu0 0.0
  %1598 = vmatprep.subr.mxu0 0.0
  %1599 = vmatpush1.xpose.msra.mxu0 0.0
  %1600 = vmatprep.subr.mxu0 0.0
  %1601 = vmatpush1.xpose.msra.mxu0 0.0
  %1602 = vmatprep.subr.mxu0 0.0
  %1603 = vmatpush1.xpose.msra.mxu0 0.0
  %1604 = vmatprep.subr.mxu0 0.0
  %1605 = vmatpush1.xpose.msra.mxu0 0.0
  %1606 = vmatprep.subr.mxu0 0.0
  %1607 = vmatpush1.xpose.msra.mxu0 0.0
  %1608 = vmatprep.subr.mxu0 0.0
  %1609 = vmatpush1.xpose.msra.mxu0 0.0
  %1610 = vmatprep.subr.mxu0 0.0
  %1611 = vmatpush1.xpose.msra.mxu0 0.0
  %1612 = vmatprep.subr.mxu0 0.0
  %1613 = vmatpush1.xpose.msra.mxu0 0.0
  %1614 = vmatprep.subr.mxu0 0.0
  %1615 = vmatpush1.xpose.msra.mxu0 %v1582
  %1616 = vmatprep.subr.mxu0 0.0
  %1617 = vmatpush2.xpose.msra.mxu0 0.0
  %1618 = vmatprep.subr.mxu0 0.0
  %1619 = vmatpush2.xpose.msra.mxu0 0.0
  %1620 = vmatprep.subr.mxu0 0.0
  %1621 = vmatpush2.xpose.msra.mxu0 0.0
  %1622 = vmatprep.subr.mxu0 0.0
  %1623 = vmatpush2.xpose.msra.mxu0 0.0
  %1624 = vmatprep.subr.mxu0 0.0
  %1625 = vmatpush2.xpose.msra.mxu0 0.0
  %1626 = vmatprep.subr.mxu0 0.0
  %1627 = vmatpush2.xpose.msra.mxu0 0.0
  %1628 = vmatprep.subr.mxu0 0.0
  %1629 = vmatpush2.xpose.msra.mxu0 0.0
  %1630 = vmatprep.subr.mxu0 0.0
  %1631 = vmatpush2.xpose.msra.mxu0 0.0
  %1632 = vmatprep.subr.mxu0 0.0
  %1633 = vmatpush2.xpose.msra.mxu0 0.0
  %1634 = vmatprep.subr.mxu0 0.0
  %1635 = vmatpush2.xpose.msra.mxu0 0.0
  %1636 = vmatprep.subr.mxu0 0.0
  %1637 = vmatpush2.xpose.msra.mxu0 0.0
  %1638 = vmatprep.subr.mxu0 0.0
  %1639 = vmatpush2.xpose.msra.mxu0 0.0
  %1640 = vmatprep.subr.mxu0 0.0
  %1641 = vmatpush2.xpose.msra.mxu0 0.0
  %1642 = vmatprep.subr.mxu0 0.0
  %1643 = vmatpush2.xpose.msra.mxu0 0.0
  %1644 = vmatprep.subr.mxu0 0.0
  %1645 = vmatpush2.xpose.msra.mxu0 0.0
  %1646 = vmatprep.subr.mxu0 0.0
  %1647 = vmatpush2.xpose.msra.mxu0 0.0
  %1648 = vmatprep.mubr.f32.mxu0 0.0
  %1649 = vmatmul.mubr.f32.gmra.mxu0 %v1580
  %v1650 = vpop.f32.mrf.mxu0
  %v1651 = vadd.f32 0.0, %v1650
  %v1652 = vpop.f32.mrf.mxu0
  %1653 = vdwg.mxu0
  %v1654 = vsel %vm147, %v1651, -inf
  %1655 = vmax.xlane.f32.xlu0 %v1654
  %v1656 = vpop.xlane.xlu0 %1655
  %v1657 = vsub.f32 %v1651, %v1656
  %v1658 = vmul.f32 %v1657, 1.442695
  %v1659 = vpow.pop %v1658
  %v1660 = vsel %vm147, %v1659, 0.0
  %1661 = vadd.xlane.f32.xlu0 %v1660
  %v1662 = vpop.xlane.xlu0 %1661
  %v1663 = vrcp.pop %v1662
  %v1664 = vmul.f32 %v1659, %v1663
  %1665 = vrot.lane.b32.xlu0 %v136, 48
  %v1666 = vpop.permute.xlu0 %1665
  %v1669 = vsel %vm147, %v1664, 0
  %1671 = vmatprep.subr.mxu0 0.0
  %1672 = vmatpush1.msra.mxu0 0.0
  %1673 = vmatprep.subr.mxu0 0.0
  %1674 = vmatpush1.msra.mxu0 0.0
  %1675 = vmatprep.subr.mxu0 0.0
  %1676 = vmatpush1.msra.mxu0 0.0
  %1677 = vmatprep.subr.mxu0 0.0
  %1678 = vmatpush1.msra.mxu0 0.0
  %1679 = vmatprep.subr.mxu0 0.0
  %1680 = vmatpush1.msra.mxu0 0.0
  %1681 = vmatprep.subr.mxu0 0.0
  %1682 = vmatpush1.msra.mxu0 0.0
  %1683 = vmatprep.subr.mxu0 0.0
  %1684 = vmatpush1.msra.mxu0 0.0
  %1685 = vmatprep.subr.mxu0 0.0
  %1686 = vmatpush1.msra.mxu0 0.0
  %1687 = vmatprep.subr.mxu0 0.0
  %1688 = vmatpush1.msra.mxu0 0.0
  %1689 = vmatprep.subr.mxu0 0.0
  %1690 = vmatpush1.msra.mxu0 0.0
  %1691 = vmatprep.subr.mxu0 0.0
  %1692 = vmatpush1.msra.mxu0 0.0
  %1693 = vmatprep.subr.mxu0 0.0
  %1694 = vmatpush1.msra.mxu0 0.0
  %1695 = vmatprep.subr.mxu0 0.0
  %1696 = vmatpush1.msra.mxu0 0.0
  %1697 = vmatprep.subr.mxu0 0.0
  %1698 = vmatpush1.msra.mxu0 0.0
  %1699 = vmatprep.subr.mxu0 0.0
  %1700 = vmatpush1.msra.mxu0 0.0
  %1701 = vmatprep.subr.mxu0 0.0
  %1702 = vmatpush1.msra.mxu0 %v1666
  %1703 = vmatprep.subr.mxu0 0.0
  %1704 = vmatpush2.msra.mxu0 0.0
  %1705 = vmatprep.subr.mxu0 0.0
  %1706 = vmatpush2.msra.mxu0 0.0
  %1707 = vmatprep.subr.mxu0 0.0
  %1708 = vmatpush2.msra.mxu0 0.0
  %1709 = vmatprep.subr.mxu0 0.0
  %1710 = vmatpush2.msra.mxu0 0.0
  %1711 = vmatprep.subr.mxu0 0.0
  %1712 = vmatpush2.msra.mxu0 0.0
  %1713 = vmatprep.subr.mxu0 0.0
  %1714 = vmatpush2.msra.mxu0 0.0
  %1715 = vmatprep.subr.mxu0 0.0
  %1716 = vmatpush2.msra.mxu0 0.0
  %1717 = vmatprep.subr.mxu0 0.0
  %1718 = vmatpush2.msra.mxu0 0.0
  %1719 = vmatprep.subr.mxu0 0.0
  %1720 = vmatpush2.msra.mxu0 0.0
  %1721 = vmatprep.subr.mxu0 0.0
  %1722 = vmatpush2.msra.mxu0 0.0
  %1723 = vmatprep.subr.mxu0 0.0
  %1724 = vmatpush2.msra.mxu0 0.0
  %1725 = vmatprep.subr.mxu0 0.0
  %1726 = vmatpush2.msra.mxu0 0.0
  %1727 = vmatprep.subr.mxu0 0.0
  %1728 = vmatpush2.msra.mxu0 0.0
  %1729 = vmatprep.subr.mxu0 0.0
  %1730 = vmatpush2.msra.mxu0 0.0
  %1731 = vmatprep.subr.mxu0 0.0
  %1732 = vmatpush2.msra.mxu0 0.0
  %1733 = vmatprep.subr.mxu0 0.0
  %1734 = vmatpush2.msra.mxu0 0.0
  %1735 = vmatprep.mubr.f32.mxu0 0.0
  %1736 = vmatmul.mubr.f32.gmra.mxu0 %v1669
  %v1737 = vpop.f32.mrf.mxu0
  %v1738 = vadd.f32 0.0, %v1737
  %v1739 = vpop.f32.mrf.mxu0
  %1740 = vdwg.mxu0
  %v1742 = vsel %vm147, %v1738, 0
  %1744 = vmatprep.subr.mxu0 0.0
  %1745 = vmatpush1.msra.mxu0 0.0
  %1746 = vmatprep.subr.mxu0 0.0
  %1747 = vmatpush1.msra.mxu0 0.0
  %1748 = vmatprep.subr.mxu0 0.0
  %1749 = vmatpush1.msra.mxu0 0.0
  %1750 = vmatprep.subr.mxu0 0.0
  %1751 = vmatpush1.msra.mxu0 0.0
  %1752 = vmatprep.subr.mxu0 0.0
  %1753 = vmatpush1.msra.mxu0 0.0
  %1754 = vmatprep.subr.mxu0 0.0
  %1755 = vmatpush1.msra.mxu0 0.0
  %1756 = vmatprep.subr.mxu0 0.0
  %1757 = vmatpush1.msra.mxu0 0.0
  %1758 = vmatprep.subr.mxu0 0.0
  %1759 = vmatpush1.msra.mxu0 0.0
  %1760 = vmatprep.subr.mxu0 0.0
  %1761 = vmatpush1.msra.mxu0 0.0
  %1762 = vmatprep.subr.mxu0 0.0
  %1763 = vmatpush1.msra.mxu0 0.0
  %1764 = vmatprep.subr.mxu0 0.0
  %1765 = vmatpush1.msra.mxu0 0.0
  %1766 = vmatprep.subr.mxu0 0.0
  %1767 = vmatpush1.msra.mxu0 0.0
  %1768 = vmatprep.subr.mxu0 0.0
  %1769 = vmatpush1.msra.mxu0 0.0
  %1770 = vmatprep.subr.mxu0 0.0
  %1771 = vmatpush1.msra.mxu0 0.0
  %1772 = vmatprep.subr.mxu0 0.0
  %1773 = vmatpush1.msra.mxu0 0.0
  %1774 = vmatprep.subr.mxu0 0.0
  %1775 = vmatpush1.msra.mxu0 %v141
  %1776 = vmatprep.subr.mxu0 0.0
  %1777 = vmatpush2.msra.mxu0 0.0
  %1778 = vmatprep.subr.mxu0 0.0
  %1779 = vmatpush2.msra.mxu0 0.0
  %1780 = vmatprep.subr.mxu0 0.0
  %1781 = vmatpush2.msra.mxu0 0.0
  %1782 = vmatprep.subr.mxu0 0.0
  %1783 = vmatpush2.msra.mxu0 0.0
  %1784 = vmatprep.subr.mxu0 0.0
  %1785 = vmatpush2.msra.mxu0 0.0
  %1786 = vmatprep.subr.mxu0 0.0
  %1787 = vmatpush2.msra.mxu0 0.0
  %1788 = vmatprep.subr.mxu0 0.0
  %1789 = vmatpush2.msra.mxu0 0.0
  %1790 = vmatprep.subr.mxu0 0.0
  %1791 = vmatpush2.msra.mxu0 0.0
  %1792 = vmatprep.subr.mxu0 0.0
  %1793 = vmatpush2.msra.mxu0 0.0
  %1794 = vmatprep.subr.mxu0 0.0
  %1795 = vmatpush2.msra.mxu0 0.0
  %1796 = vmatprep.subr.mxu0 0.0
  %1797 = vmatpush2.msra.mxu0 0.0
  %1798 = vmatprep.subr.mxu0 0.0
  %1799 = vmatpush2.msra.mxu0 0.0
  %1800 = vmatprep.subr.mxu0 0.0
  %1801 = vmatpush2.msra.mxu0 0.0
  %1802 = vmatprep.subr.mxu0 0.0
  %1803 = vmatpush2.msra.mxu0 0.0
  %1804 = vmatprep.subr.mxu0 0.0
  %1805 = vmatpush2.msra.mxu0 0.0
  %1806 = vmatprep.subr.mxu0 0.0
  %1807 = vmatpush2.msra.mxu0 0.0
  %1808 = vmatprep.mubr.f32.mxu0 0.0
  %1809 = vmatmul.mubr.f32.gmra.mxu0 %v1742
  %v1810 = vpop.f32.mrf.mxu0
  %v1811 = vadd.f32 0.0, %v1810
  %v1812 = vpop.f32.mrf.mxu0
  %1813 = vdwg.mxu0
  %v1814 = vadd.f32 %v1573, %v1811
  %1815 = vrot.lane.b32.xlu0 %v1099, 104
  %v1816 = vpop.permute.xlu0 %1815
  %1817 = vrot.lane.b32.xlu0 %v136, 72
  %v1818 = vpop.permute.xlu0 %1817
  %v1819 = vsel %vm147, %v1816, 0
  %v1821 = vsel %vm147, %v1818, 0
  %1823 = vmatprep.subr.mxu0 0.0
  %1824 = vmatpush1.xpose.msra.mxu0 0.0
  %1825 = vmatprep.subr.mxu0 0.0
  %1826 = vmatpush1.xpose.msra.mxu0 0.0
  %1827 = vmatprep.subr.mxu0 0.0
  %1828 = vmatpush1.xpose.msra.mxu0 0.0
  %1829 = vmatprep.subr.mxu0 0.0
  %1830 = vmatpush1.xpose.msra.mxu0 0.0
  %1831 = vmatprep.subr.mxu0 0.0
  %1832 = vmatpush1.xpose.msra.mxu0 0.0
  %1833 = vmatprep.subr.mxu0 0.0
  %1834 = vmatpush1.xpose.msra.mxu0 0.0
  %1835 = vmatprep.subr.mxu0 0.0
  %1836 = vmatpush1.xpose.msra.mxu0 0.0
  %1837 = vmatprep.subr.mxu0 0.0
  %1838 = vmatpush1.xpose.msra.mxu0 0.0
  %1839 = vmatprep.subr.mxu0 0.0
  %1840 = vmatpush1.xpose.msra.mxu0 0.0
  %1841 = vmatprep.subr.mxu0 0.0
  %1842 = vmatpush1.xpose.msra.mxu0 0.0
  %1843 = vmatprep.subr.mxu0 0.0
  %1844 = vmatpush1.xpose.msra.mxu0 0.0
  %1845 = vmatprep.subr.mxu0 0.0
  %1846 = vmatpush1.xpose.msra.mxu0 0.0
  %1847 = vmatprep.subr.mxu0 0.0
  %1848 = vmatpush1.xpose.msra.mxu0 0.0
  %1849 = vmatprep.subr.mxu0 0.0
  %1850 = vmatpush1.xpose.msra.mxu0 0.0
  %1851 = vmatprep.subr.mxu0 0.0
  %1852 = vmatpush1.xpose.msra.mxu0 0.0
  %1853 = vmatprep.subr.mxu0 0.0
  %1854 = vmatpush1.xpose.msra.mxu0 %v1821
  %1855 = vmatprep.subr.mxu0 0.0
  %1856 = vmatpush2.xpose.msra.mxu0 0.0
  %1857 = vmatprep.subr.mxu0 0.0
  %1858 = vmatpush2.xpose.msra.mxu0 0.0
  %1859 = vmatprep.subr.mxu0 0.0
  %1860 = vmatpush2.xpose.msra.mxu0 0.0
  %1861 = vmatprep.subr.mxu0 0.0
  %1862 = vmatpush2.xpose.msra.mxu0 0.0
  %1863 = vmatprep.subr.mxu0 0.0
  %1864 = vmatpush2.xpose.msra.mxu0 0.0
  %1865 = vmatprep.subr.mxu0 0.0
  %1866 = vmatpush2.xpose.msra.mxu0 0.0
  %1867 = vmatprep.subr.mxu0 0.0
  %1868 = vmatpush2.xpose.msra.mxu0 0.0
  %1869 = vmatprep.subr.mxu0 0.0
  %1870 = vmatpush2.xpose.msra.mxu0 0.0
  %1871 = vmatprep.subr.mxu0 0.0
  %1872 = vmatpush2.xpose.msra.mxu0 0.0
  %1873 = vmatprep.subr.mxu0 0.0
  %1874 = vmatpush2.xpose.msra.mxu0 0.0
  %1875 = vmatprep.subr.mxu0 0.0
  %1876 = vmatpush2.xpose.msra.mxu0 0.0
  %1877 = vmatprep.subr.mxu0 0.0
  %1878 = vmatpush2.xpose.msra.mxu0 0.0
  %1879 = vmatprep.subr.mxu0 0.0
  %1880 = vmatpush2.xpose.msra.mxu0 0.0
  %1881 = vmatprep.subr.mxu0 0.0
  %1882 = vmatpush2.xpose.msra.mxu0 0.0
  %1883 = vmatprep.subr.mxu0 0.0
  %1884 = vmatpush2.xpose.msra.mxu0 0.0
  %1885 = vmatprep.subr.mxu0 0.0
  %1886 = vmatpush2.xpose.msra.mxu0 0.0
  %1887 = vmatprep.mubr.f32.mxu0 0.0
  %1888 = vmatmul.mubr.f32.gmra.mxu0 %v1819
  %v1889 = vpop.f32.mrf.mxu0
  %v1890 = vadd.f32 0.0, %v1889
  %v1891 = vpop.f32.mrf.mxu0
  %1892 = vdwg.mxu0
  %v1893 = vsel %vm147, %v1890, -inf
  %1894 = vmax.xlane.f32.xlu0 %v1893
  %v1895 = vpop.xlane.xlu0 %1894
  %v1896 = vsub.f32 %v1890, %v1895
  %v1897 = vmul.f32 %v1896, 1.442695
  %v1898 = vpow.pop %v1897
  %v1899 = vsel %vm147, %v1898, 0.0
  %1900 = vadd.xlane.f32.xlu0 %v1899
  %v1901 = vpop.xlane.xlu0 %1900
  %v1902 = vrcp.pop %v1901
  %v1903 = vmul.f32 %v1898, %v1902
  %1904 = vrot.lane.b32.xlu0 %v136, 40
  %v1905 = vpop.permute.xlu0 %1904
  %v1908 = vsel %vm147, %v1903, 0
  %1910 = vmatprep.subr.mxu0 0.0
  %1911 = vmatpush1.msra.mxu0 0.0
  %1912 = vmatprep.subr.mxu0 0.0
  %1913 = vmatpush1.msra.mxu0 0.0
  %1914 = vmatprep.subr.mxu0 0.0
  %1915 = vmatpush1.msra.mxu0 0.0
  %1916 = vmatprep.subr.mxu0 0.0
  %1917 = vmatpush1.msra.mxu0 0.0
  %1918 = vmatprep.subr.mxu0 0.0
  %1919 = vmatpush1.msra.mxu0 0.0
  %1920 = vmatprep.subr.mxu0 0.0
  %1921 = vmatpush1.msra.mxu0 0.0
  %1922 = vmatprep.subr.mxu0 0.0
  %1923 = vmatpush1.msra.mxu0 0.0
  %1924 = vmatprep.subr.mxu0 0.0
  %1925 = vmatpush1.msra.mxu0 0.0
  %1926 = vmatprep.subr.mxu0 0.0
  %1927 = vmatpush1.msra.mxu0 0.0
  %1928 = vmatprep.subr.mxu0 0.0
  %1929 = vmatpush1.msra.mxu0 0.0
  %1930 = vmatprep.subr.mxu0 0.0
  %1931 = vmatpush1.msra.mxu0 0.0
  %1932 = vmatprep.subr.mxu0 0.0
  %1933 = vmatpush1.msra.mxu0 0.0
  %1934 = vmatprep.subr.mxu0 0.0
  %1935 = vmatpush1.msra.mxu0 0.0
  %1936 = vmatprep.subr.mxu0 0.0
  %1937 = vmatpush1.msra.mxu0 0.0
  %1938 = vmatprep.subr.mxu0 0.0
  %1939 = vmatpush1.msra.mxu0 0.0
  %1940 = vmatprep.subr.mxu0 0.0
  %1941 = vmatpush1.msra.mxu0 %v1905
  %1942 = vmatprep.subr.mxu0 0.0
  %1943 = vmatpush2.msra.mxu0 0.0
  %1944 = vmatprep.subr.mxu0 0.0
  %1945 = vmatpush2.msra.mxu0 0.0
  %1946 = vmatprep.subr.mxu0 0.0
  %1947 = vmatpush2.msra.mxu0 0.0
  %1948 = vmatprep.subr.mxu0 0.0
  %1949 = vmatpush2.msra.mxu0 0.0
  %1950 = vmatprep.subr.mxu0 0.0
  %1951 = vmatpush2.msra.mxu0 0.0
  %1952 = vmatprep.subr.mxu0 0.0
  %1953 = vmatpush2.msra.mxu0 0.0
  %1954 = vmatprep.subr.mxu0 0.0
  %1955 = vmatpush2.msra.mxu0 0.0
  %1956 = vmatprep.subr.mxu0 0.0
  %1957 = vmatpush2.msra.mxu0 0.0
  %1958 = vmatprep.subr.mxu0 0.0
  %1959 = vmatpush2.msra.mxu0 0.0
  %1960 = vmatprep.subr.mxu0 0.0
  %1961 = vmatpush2.msra.mxu0 0.0
  %1962 = vmatprep.subr.mxu0 0.0
  %1963 = vmatpush2.msra.mxu0 0.0
  %1964 = vmatprep.subr.mxu0 0.0
  %1965 = vmatpush2.msra.mxu0 0.0
  %1966 = vmatprep.subr.mxu0 0.0
  %1967 = vmatpush2.msra.mxu0 0.0
  %1968 = vmatprep.subr.mxu0 0.0
  %1969 = vmatpush2.msra.mxu0 0.0
  %1970 = vmatprep.subr.mxu0 0.0
  %1971 = vmatpush2.msra.mxu0 0.0
  %1972 = vmatprep.subr.mxu0 0.0
  %1973 = vmatpush2.msra.mxu0 0.0
  %1974 = vmatprep.mubr.f32.mxu0 0.0
  %1975 = vmatmul.mubr.f32.gmra.mxu0 %v1908
  %v1976 = vpop.f32.mrf.mxu0
  %v1977 = vadd.f32 0.0, %v1976
  %v1978 = vpop.f32.mrf.mxu0
  %1979 = vdwg.mxu0
  %v1981 = vsel %vm147, %v1977, 0
  %1983 = vmatprep.subr.mxu0 0.0
  %1984 = vmatpush1.msra.mxu0 0.0
  %1985 = vmatprep.subr.mxu0 0.0
  %1986 = vmatpush1.msra.mxu0 0.0
  %1987 = vmatprep.subr.mxu0 0.0
  %1988 = vmatpush1.msra.mxu0 0.0
  %1989 = vmatprep.subr.mxu0 0.0
  %1990 = vmatpush1.msra.mxu0 0.0
  %1991 = vmatprep.subr.mxu0 0.0
  %1992 = vmatpush1.msra.mxu0 0.0
  %1993 = vmatprep.subr.mxu0 0.0
  %1994 = vmatpush1.msra.mxu0 0.0
  %1995 = vmatprep.subr.mxu0 0.0
  %1996 = vmatpush1.msra.mxu0 0.0
  %1997 = vmatprep.subr.mxu0 0.0
  %1998 = vmatpush1.msra.mxu0 0.0
  %1999 = vmatprep.subr.mxu0 0.0
  %2000 = vmatpush1.msra.mxu0 0.0
  %2001 = vmatprep.subr.mxu0 0.0
  %2002 = vmatpush1.msra.mxu0 0.0
  %2003 = vmatprep.subr.mxu0 0.0
  %2004 = vmatpush1.msra.mxu0 0.0
  %2005 = vmatprep.subr.mxu0 0.0
  %2006 = vmatpush1.msra.mxu0 0.0
  %2007 = vmatprep.subr.mxu0 0.0
  %2008 = vmatpush1.msra.mxu0 0.0
  %2009 = vmatprep.subr.mxu0 0.0
  %2010 = vmatpush1.msra.mxu0 0.0
  %2011 = vmatprep.subr.mxu0 0.0
  %2012 = vmatpush1.msra.mxu0 0.0
  %2013 = vmatprep.subr.mxu0 0.0
  %2014 = vmatpush1.msra.mxu0 %v142
  %2015 = vmatprep.subr.mxu0 0.0
  %2016 = vmatpush2.msra.mxu0 0.0
  %2017 = vmatprep.subr.mxu0 0.0
  %2018 = vmatpush2.msra.mxu0 0.0
  %2019 = vmatprep.subr.mxu0 0.0
  %2020 = vmatpush2.msra.mxu0 0.0
  %2021 = vmatprep.subr.mxu0 0.0
  %2022 = vmatpush2.msra.mxu0 0.0
  %2023 = vmatprep.subr.mxu0 0.0
  %2024 = vmatpush2.msra.mxu0 0.0
  %2025 = vmatprep.subr.mxu0 0.0
  %2026 = vmatpush2.msra.mxu0 0.0
  %2027 = vmatprep.subr.mxu0 0.0
  %2028 = vmatpush2.msra.mxu0 0.0
  %2029 = vmatprep.subr.mxu0 0.0
  %2030 = vmatpush2.msra.mxu0 0.0
  %2031 = vmatprep.subr.mxu0 0.0
  %2032 = vmatpush2.msra.mxu0 0.0
  %2033 = vmatprep.subr.mxu0 0.0
  %2034 = vmatpush2.msra.mxu0 0.0
  %2035 = vmatprep.subr.mxu0 0.0
  %2036 = vmatpush2.msra.mxu0 0.0
  %2037 = vmatprep.subr.mxu0 0.0
  %2038 = vmatpush2.msra.mxu0 0.0
  %2039 = vmatprep.subr.mxu0 0.0
  %2040 = vmatpush2.msra.mxu0 0.0
  %2041 = vmatprep.subr.mxu0 0.0
  %2042 = vmatpush2.msra.mxu0 0.0
  %2043 = vmatprep.subr.mxu0 0.0
  %2044 = vmatpush2.msra.mxu0 0.0
  %2045 = vmatprep.subr.mxu0 0.0
  %2046 = vmatpush2.msra.mxu0 0.0
  %2047 = vmatprep.mubr.f32.mxu0 0.0
  %2048 = vmatmul.mubr.f32.gmra.mxu0 %v1981
  %v2049 = vpop.f32.mrf.mxu0
  %v2050 = vadd.f32 0.0, %v2049
  %v2051 = vpop.f32.mrf.mxu0
  %2052 = vdwg.mxu0
  %v2053 = vadd.f32 %v1814, %v2050
  %v2054 = vld [vmem:[%s4] sm:$0x1]
  %v2056 = vlaneseq
  %v2057 = vshrl.u32 %v2056, 7
  %v2058 = vsub.s32 0, %v2057
  %v2059 = vrot.slane %v2054, %v2058
  %v2061 = vadd.f32 %v1098, %v2059
  %v2062 = vadd.f32 %v2053, %v2059
  %v2063 = vadd.f32 %v44, %v2061
  %v2064 = vadd.f32 %v45, %v2062
  %v2065 = vsel %vm57, %v2063, 0.0
  %2066 = vadd.xlane.f32.xlu0 %v2065
  %v2067 = vpop.xlane.xlu0 %2066
  %v2068 = vsel %vm57, %v2064, 0.0
  %2069 = vadd.xlane.f32.xlu0 %v2068
  %v2070 = vpop.xlane.xlu0 %2069
  %v2071 = vrcp.pop 32.0
  %v2072 = vmul.f32 %v2067, %v2071
  %v2073 = vmul.f32 %v2070, %v2071
  %v2074 = vsub.f32 %v2063, %v2072
  %v2075 = vsub.f32 %v2064, %v2073
  %v2076 = vmul.f32 %v2074, %v2074
  %v2077 = vmul.f32 %v2075, %v2075
  %v2078 = vsel %vm57, %v2076, 0.0
  %2079 = vadd.xlane.f32.xlu0 %v2078
  %v2080 = vpop.xlane.xlu0 %2079
  %v2081 = vsel %vm57, %v2077, 0.0
  %2082 = vadd.xlane.f32.xlu0 %v2081
  %v2083 = vpop.xlane.xlu0 %2082
  %v2084 = vmul.f32 %v2080, %v2071
  %v2085 = vmul.f32 %v2083, %v2071
  %v2086 = vadd.f32 %v2084, 1e-05
  %v2087 = vadd.f32 %v2085, 1e-05
  %v2088 = vrsqrt.pop %v2086
  %v2089 = vrsqrt.pop %v2087
  %v2090 = vmul.f32 %v2074, %v2088
  %v2091 = vmul.f32 %v2075, %v2089
  %v2092 = vld [vmem:[%s9] sm:$0x1]
  %v2094 = vlaneseq
  %v2095 = vshrl.u32 %v2094, 7
  %v2096 = vsub.s32 0, %v2095
  %v2097 = vrot.slane %v2092, %v2096
  %v2099 = vmul.f32 %v2090, %v2097
  %v2100 = vmul.f32 %v2091, %v2097
  %v2101 = vld [vmem:[%s10] sm:$0x1]
  %v2103 = vlaneseq
  %v2104 = vshrl.u32 %v2103, 7
  %v2105 = vsub.s32 0, %v2104
  %v2106 = vrot.slane %v2101, %v2105
  %v2108 = vadd.f32 %v2099, %v2106
  %v2109 = vadd.f32 %v2100, %v2106
  %v2110 = vld [vmem:[%s5] sm:$0xff]
  %v2111 = vld [vmem:[%s5 + $0x8] sm:$0xff]
  %v2112 = vld [vmem:[%s5 + $0x10] sm:$0xff]
  %v2113 = vld [vmem:[%s5 + $0x18] sm:$0xff]
  %v2114 = vld [vmem:[%s6] sm:$0x1]
  %v2116 = vlaneseq
  %v2117 = vshrl.u32 %v2116, 7
  %v2118 = vsub.s32 0, %v2117
  %v2119 = vrot.slane %v2114, %v2118
  %v2122 = vsel %vm57, %v2108, 0
  %v2125 = vsel %vm57, %v2109, 0
  %2127 = vmatprep.subr.mxu0 0.0
  %2128 = vmatpush1.msra.mxu0 0.0
  %2129 = vmatprep.subr.mxu0 0.0
  %2130 = vmatpush1.msra.mxu0 0.0
  %2131 = vmatprep.subr.mxu0 0.0
  %2132 = vmatpush1.msra.mxu0 0.0
  %2133 = vmatprep.subr.mxu0 0.0
  %2134 = vmatpush1.msra.mxu0 0.0
  %2135 = vmatprep.subr.mxu0 0.0
  %2136 = vmatpush1.msra.mxu0 0.0
  %2137 = vmatprep.subr.mxu0 0.0
  %2138 = vmatpush1.msra.mxu0 0.0
  %2139 = vmatprep.subr.mxu0 0.0
  %2140 = vmatpush1.msra.mxu0 0.0
  %2141 = vmatprep.subr.mxu0 0.0
  %2142 = vmatpush1.msra.mxu0 0.0
  %2143 = vmatprep.subr.mxu0 0.0
  %2144 = vmatpush1.msra.mxu0 0.0
  %2145 = vmatprep.subr.mxu0 0.0
  %2146 = vmatpush1.msra.mxu0 0.0
  %2147 = vmatprep.subr.mxu0 0.0
  %2148 = vmatpush1.msra.mxu0 0.0
  %2149 = vmatprep.subr.mxu0 0.0
  %2150 = vmatpush1.msra.mxu0 0.0
  %2151 = vmatprep.subr.mxu0 0.0
  %2152 = vmatpush1.msra.mxu0 %v2113
  %2153 = vmatprep.subr.mxu0 0.0
  %2154 = vmatpush1.msra.mxu0 %v2112
  %2155 = vmatprep.subr.mxu0 0.0
  %2156 = vmatpush1.msra.mxu0 %v2111
  %2157 = vmatprep.subr.mxu0 0.0
  %2158 = vmatpush1.msra.mxu0 %v2110
  %2159 = vmatprep.subr.mxu0 0.0
  %2160 = vmatpush2.msra.mxu0 0.0
  %2161 = vmatprep.subr.mxu0 0.0
  %2162 = vmatpush2.msra.mxu0 0.0
  %2163 = vmatprep.subr.mxu0 0.0
  %2164 = vmatpush2.msra.mxu0 0.0
  %2165 = vmatprep.subr.mxu0 0.0
  %2166 = vmatpush2.msra.mxu0 0.0
  %2167 = vmatprep.subr.mxu0 0.0
  %2168 = vmatpush2.msra.mxu0 0.0
  %2169 = vmatprep.subr.mxu0 0.0
  %2170 = vmatpush2.msra.mxu0 0.0
  %2171 = vmatprep.subr.mxu0 0.0
  %2172 = vmatpush2.msra.mxu0 0.0
  %2173 = vmatprep.subr.mxu0 0.0
  %2174 = vmatpush2.msra.mxu0 0.0
  %2175 = vmatprep.subr.mxu0 0.0
  %2176 = vmatpush2.msra.mxu0 0.0
  %2177 = vmatprep.subr.mxu0 0.0
  %2178 = vmatpush2.msra.mxu0 0.0
  %2179 = vmatprep.subr.mxu0 0.0
  %2180 = vmatpush2.msra.mxu0 0.0
  %2181 = vmatprep.subr.mxu0 0.0
  %2182 = vmatpush2.msra.mxu0 0.0
  %2183 = vmatprep.subr.mxu0 0.0
  %2184 = vmatpush2.msra.mxu0 0.0
  %2185 = vmatprep.subr.mxu0 0.0
  %2186 = vmatpush2.msra.mxu0 0.0
  %2187 = vmatprep.subr.mxu0 0.0
  %2188 = vmatpush2.msra.mxu0 0.0
  %2189 = vmatprep.subr.mxu0 0.0
  %2190 = vmatpush2.msra.mxu0 0.0
  %2191 = vmatprep.mubr.f32.mxu0 0.0
  %2192 = vmatmul.mubr.f32.gmra.mxu0 %v2122
  %v2193 = vpop.f32.mrf.mxu0
  %v2194 = vadd.f32 %v2119, %v2193
  %v2195 = vpop.f32.mrf.mxu0
  %2196 = vmatprep.mubr.f32.mxu0 0.0
  %2197 = vmatmul.mubr.f32.gmra.mxu0 %v2125
  %v2198 = vpop.f32.mrf.mxu0
  %v2199 = vadd.f32 %v2119, %v2198
  %v2200 = vpop.f32.mrf.mxu0
  %2201 = vdwg.mxu0
  %v2202 = vmax.f32 %v2194, 0.0
  %v2203 = vmax.f32 %v2199, 0.0
  %v2204 = vld [vmem:[%s7] sm:$0xff]
  %v2205 = vld [vmem:[%s7 + $0x8] sm:$0xff]
  %v2206 = vld [vmem:[%s7 + $0x10] sm:$0xff]
  %v2207 = vld [vmem:[%s7 + $0x18] sm:$0xff]
  %v2208 = vld [vmem:[%s7 + $0x20] sm:$0xff]
  %v2209 = vld [vmem:[%s7 + $0x28] sm:$0xff]
  %v2210 = vld [vmem:[%s7 + $0x30] sm:$0xff]
  %v2211 = vld [vmem:[%s7 + $0x38] sm:$0xff]
  %v2212 = vld [vmem:[%s8] sm:$0x1]
  %v2214 = vlaneseq
  %v2215 = vshrl.u32 %v2214, 7
  %v2216 = vsub.s32 0, %v2215
  %v2217 = vrot.slane %v2212, %v2216
  %vm2219 = vcmask 523264
  %v2221 = vsel %vm2219, %v2202, 0
  %v2224 = vsel %vm2219, %v2203, 0
  %2226 = vmatprep.subr.mxu0 0.0
  %2227 = vmatpush1.msra.mxu0 0.0
  %2228 = vmatprep.subr.mxu0 0.0
  %2229 = vmatpush1.msra.mxu0 0.0
  %2230 = vmatprep.subr.mxu0 0.0
  %2231 = vmatpush1.msra.mxu0 0.0
  %2232 = vmatprep.subr.mxu0 0.0
  %2233 = vmatpush1.msra.mxu0 0.0
  %2234 = vmatprep.subr.mxu0 0.0
  %2235 = vmatpush1.msra.mxu0 0.0
  %2236 = vmatprep.subr.mxu0 0.0
  %2237 = vmatpush1.msra.mxu0 0.0
  %2238 = vmatprep.subr.mxu0 0.0
  %2239 = vmatpush1.msra.mxu0 0.0
  %2240 = vmatprep.subr.mxu0 0.0
  %2241 = vmatpush1.msra.mxu0 0.0
  %2242 = vmatprep.subr.mxu0 0.0
  %2243 = vmatpush1.msra.mxu0 %v2211
  %2244 = vmatprep.subr.mxu0 0.0
  %2245 = vmatpush1.msra.mxu0 %v2210
  %2246 = vmatprep.subr.mxu0 0.0
  %2247 = vmatpush1.msra.mxu0 %v2209
  %2248 = vmatprep.subr.mxu0 0.0
  %2249 = vmatpush1.msra.mxu0 %v2208
  %2250 = vmatprep.subr.mxu0 0.0
  %2251 = vmatpush1.msra.mxu0 %v2207
  %2252 = vmatprep.subr.mxu0 0.0
  %2253 = vmatpush1.msra.mxu0 %v2206
  %2254 = vmatprep.subr.mxu0 0.0
  %2255 = vmatpush1.msra.mxu0 %v2205
  %2256 = vmatprep.subr.mxu0 0.0
  %2257 = vmatpush1.msra.mxu0 %v2204
  %2258 = vmatprep.subr.mxu0 0.0
  %2259 = vmatpush2.msra.mxu0 0.0
  %2260 = vmatprep.subr.mxu0 0.0
  %2261 = vmatpush2.msra.mxu0 0.0
  %2262 = vmatprep.subr.mxu0 0.0
  %2263 = vmatpush2.msra.mxu0 0.0
  %2264 = vmatprep.subr.mxu0 0.0
  %2265 = vmatpush2.msra.mxu0 0.0
  %2266 = vmatprep.subr.mxu0 0.0
  %2267 = vmatpush2.msra.mxu0 0.0
  %2268 = vmatprep.subr.mxu0 0.0
  %2269 = vmatpush2.msra.mxu0 0.0
  %2270 = vmatprep.subr.mxu0 0.0
  %2271 = vmatpush2.msra.mxu0 0.0
  %2272 = vmatprep.subr.mxu0 0.0
  %2273 = vmatpush2.msra.mxu0 0.0
  %2274 = vmatprep.subr.mxu0 0.0
  %2275 = vmatpush2.msra.mxu0 0.0
  %2276 = vmatprep.subr.mxu0 0.0
  %2277 = vmatpush2.msra.mxu0 0.0
  %2278 = vmatprep.subr.mxu0 0.0
  %2279 = vmatpush2.msra.mxu0 0.0
  %2280 = vmatprep.subr.mxu0 0.0
  %2281 = vmatpush2.msra.mxu0 0.0
  %2282 = vmatprep.subr.mxu0 0.0
  %2283 = vmatpush2.msra.mxu0 0.0
  %2284 = vmatprep.subr.mxu0 0.0
  %2285 = vmatpush2.msra.mxu0 0.0
  %2286 = vmatprep.subr.mxu0 0.0
  %2287 = vmatpush2.msra.mxu0 0.0
  %2288 = vmatprep.subr.mxu0 0.0
  %2289 = vmatpush2.msra.mxu0 0.0
  %2290 = vmatprep.mubr.f32.mxu0 0.0
  %2291 = vmatmul.mubr.f32.gmra.mxu0 %v2221
  %v2292 = vpop.f32.mrf.mxu0
  %v2293 = vadd.f32 %v2217, %v2292
  %v2294 = vpop.f32.mrf.mxu0
  %2295 = vmatprep.mubr.f32.mxu0 0.0
  %2296 = vmatmul.mubr.f32.gmra.mxu0 %v2224
  %v2297 = vpop.f32.mrf.mxu0
  %v2298 = vadd.f32 %v2217, %v2297
  %v2299 = vpop.f32.mrf.mxu0
  %2300 = vdwg.mxu0
  %v2301 = vadd.f32 %v2108, %v2293
  %v2302 = vadd.f32 %v2109, %v2298
  %v2303 = vsel %vm57, %v2301, 0.0
  %2304 = vadd.xlane.f32.xlu0 %v2303
  %v2305 = vpop.xlane.xlu0 %2304
  %v2306 = vsel %vm57, %v2302, 0.0
  %2307 = vadd.xlane.f32.xlu0 %v2306
  %v2308 = vpop.xlane.xlu0 %2307
  %v2309 = vmul.f32 %v2305, %v2071
  %v2310 = vmul.f32 %v2308, %v2071
  %v2311 = vsub.f32 %v2301, %v2309
  %v2312 = vsub.f32 %v2302, %v2310
  %v2313 = vmul.f32 %v2311, %v2311
  %v2314 = vmul.f32 %v2312, %v2312
  %v2315 = vsel %vm57, %v2313, 0.0
  %2316 = vadd.xlane.f32.xlu0 %v2315
  %v2317 = vpop.xlane.xlu0 %2316
  %v2318 = vsel %vm57, %v2314, 0.0
  %2319 = vadd.xlane.f32.xlu0 %v2318
  %v2320 = vpop.xlane.xlu0 %2319
  %v2321 = vmul.f32 %v2317, %v2071
  %v2322 = vmul.f32 %v2320, %v2071
  %v2323 = vadd.f32 %v2321, 1e-05
  %v2324 = vadd.f32 %v2322, 1e-05
  %v2325 = vrsqrt.pop %v2323
  %v2326 = vrsqrt.pop %v2324
  %v2327 = vmul.f32 %v2311, %v2325
  %v2328 = vmul.f32 %v2312, %v2326
  %v2329 = vld [vmem:[%s11] sm:$0x1]
  %v2331 = vlaneseq
  %v2332 = vshrl.u32 %v2331, 7
  %v2333 = vsub.s32 0, %v2332
  %v2334 = vrot.slane %v2329, %v2333
  %v2336 = vmul.f32 %v2327, %v2334
  %v2337 = vmul.f32 %v2328, %v2334
  %v2338 = vld [vmem:[%s12] sm:$0x1]
  %v2340 = vlaneseq
  %v2341 = vshrl.u32 %v2340, 7
  %v2342 = vsub.s32 0, %v2341
  %v2343 = vrot.slane %v2338, %v2342
  %v2345 = vadd.f32 %v2336, %v2343
  %v2346 = vadd.f32 %v2337, %v2343
  %2347 = vst.msk [vmem:[%s13] sm:$0xff] %vm57, %v2345
  %2348 = vst.msk [vmem:[%s13 + $0x8] sm:$0xff] %vm57, %v2346
  // Predicated region
  $region54: #{transformer_encoder_layer.1} parent=0 // pred_check
    _
  $region55: #{transformer_encoder_layer.1} parent=0 // pred_check_branch
    %2350 = sbr.rel (0) target = $region57
  $region56: #{transformer_encoder_layer.1} parent=0 // pred_region
    _
  $region57: #{transformer_encoder_layer.1} parent=0 // pred_fallthru
    _
  // Predicated region
  $region58: #{transformer_encoder_layer.1} parent=0 // pred_check
    _
  $region59: #{transformer_encoder_layer.1} parent=0 // pred_check_branch
    %2352 = sbr.rel (0) target = $region61
  $region60: #{transformer_encoder_layer.1} parent=0 // pred_region
    _
  $region61: #{transformer_encoder_layer.1} parent=0 // pred_fallthru
    _

</llo_original>
